<compile_context>
chip_gen: v7x
topology: tpu7x:2x2x1
jax: 0.10.0
libtpu: 0.0.40
codegen_flags: <defaults>
</compile_context>

<pallas_src>
import functools

import jax
import jax.numpy as jnp
from jax.experimental import pallas as pl
from jax.experimental.pallas import tpu as pltpu


_LANE = 128
_MAX_TM = 512                     # lane-tile cap: v7x (64 MiB VMEM) safe, ~85% roofline
_VMEM_LIMIT = 32 * 1024 * 1024    # blocks here are tiny; raise together with tm for huge M


def _round_up(x, m):
    return ((x + m - 1) // m) * m


def _choose_tm(m):
    """Pick (tm, m_pad) for the M lane axis: 128-multiple tiles, prefer exactly
    2 equal tiles for small/medium M so v7x's 2 TensorCores both get work."""
    m128 = _round_up(m, _LANE)
    if m128 <= _LANE:
        return _LANE, _LANE
    if m128 <= 2 * _MAX_TM:
        tm = _round_up(m, 2 * _LANE) // 2
        return tm, 2 * tm
    return _MAX_TM, _round_up(m, _MAX_TM)


def _choose_tmq(npp, cap=_MAX_TM):
    """Lane tile for the pooled-output axis: 128-multiple divisor of npp."""
    tmq = min(cap, npp)
    while npp % tmq:
        tmq -= _LANE
    return max(tmq, _LANE)


def _choose_tc(n_ch, cap=64):
    """Channel tile for the BN kernel: multiple of 8 dividing n_ch, <= cap."""
    tc = min(n_ch, cap)
    while n_ch % tc or tc % 8:
        tc -= 8
    return max(tc, 8)


# ----------------------------- Pallas kernels ------------------------------

def _stacked_cmplx_matmul_kernel(w_ref, p_ref, o_ref):
    """One real MXU matmul implementing a complex matmul.

    w_ref: (2N, 2K) = [[Wre, -Wim], [Wim, Wre]]  (bf16, resident across grid)
    p_ref: (2K, tm) = [Pre; Pim] lane tile        (bf16)
    o_ref: (2N, tm) = [Ore; Oim] lane tile        (f32 acc, stored as o_ref.dtype)
    """
    o_ref[...] = jnp.dot(w_ref[...], p_ref[...],
                         preferred_element_type=jnp.float32).astype(o_ref.dtype)


def _conv2_pool_relu_kernel(w_ref, p0_ref, p1_ref, p2_ref, p3_ref,
                            ore_ref, oim_ref):
    """Complex conv matmul fused with MaxMagPool(2,2) + ReLUCmplx('c').

    p{j}_ref holds the patch columns of pooling-window candidate j for the same
    pooled-output lane tile; the 4 candidate matmuls are reduced with max-|z|
    before a single (N, tmq) f32 store per component.
    """
    n = ore_ref.shape[0]
    best_re = best_im = best_mag = None
    for p_ref in (p0_ref, p1_ref, p2_ref, p3_ref):
        o = jnp.dot(w_ref[...], p_ref[...], preferred_element_type=jnp.float32)
        re, im = o[:n], o[n:]
        mag = re * re + im * im
        if best_re is None:
            best_re, best_im, best_mag = re, im, mag
        else:
            take = mag > best_mag            # '>' keeps first candidate on ties
            best_re = jnp.where(take, re, best_re)
            best_im = jnp.where(take, im, best_im)
            best_mag = jnp.where(take, mag, best_mag)
    # ReLUCmplx (relu_type='c'): relu each component.
    ore_ref[...] = jnp.maximum(best_re, 0.0)
    oim_ref[...] = jnp.maximum(best_im, 0.0)


def _bn_kernel(re_ref, im_ref, ore_ref, oim_ref, *, true_n):
    """BatchNormCmplx: split per-component batch stats (training mode, no affine).

    INVARIANT: each (tc, npp) block spans the FULL lane axis of its channels, so
    the per-channel batch statistics are complete in one block.  Lanes >= true_n
    are zero padding and are masked out of the statistics exactly.
    """
    eps = 1e-5
    inv_n = 1.0 / true_n
    valid = jax.lax.broadcasted_iota(jnp.int32, re_ref.shape, 1) < true_n
    for src_ref, dst_ref in ((re_ref, ore_ref), (im_ref, oim_ref)):
        x = src_ref[...]
        mean = jnp.sum(x, axis=-1, keepdims=True) * inv_n   # padded lanes are zero
        xc = jnp.where(valid, x - mean, 0.0)                # masked, two-pass variance
        var = jnp.sum(xc * xc, axis=-1, keepdims=True) * inv_n
        dst_ref[...] = xc * jax.lax.rsqrt(var + eps)


# ------------------------------ pallas_call glue ----------------------------

def stacked_cmplx_matmul(w_stack, p_stack, *, tm, out_dtype=jnp.float32):
    """(2N, 2K) @ (2K, M) -> (2N, M), M tiled on the lane axis."""
    w_stack = w_stack.astype(jnp.bfloat16)
    p_stack = p_stack.astype(jnp.bfloat16)
    two_n, two_k = w_stack.shape
    assert p_stack.shape[0] == two_k
    m = p_stack.shape[1]
    assert m % tm == 0 and tm % _LANE == 0, (m, tm)
    flops = 2 * two_n * two_k * m
    bytes_accessed = (w_stack.size + p_stack.size) * 2 + two_n * m * jnp.dtype(out_dtype).itemsize
    return pl.pallas_call(
        _stacked_cmplx_matmul_kernel,
        grid=(m // tm,),
        in_specs=[
            pl.BlockSpec((two_n, two_k), lambda i: (0, 0)),   # weight: resident
            pl.BlockSpec((two_k, tm), lambda i: (0, i)),      # patches: M-tiled
        ],
        out_specs=pl.BlockSpec((two_n, tm), lambda i: (0, i)),
        out_shape=jax.ShapeDtypeStruct((two_n, m), out_dtype),
        compiler_params=pltpu.CompilerParams(
            dimension_semantics=("parallel",),                # v7x: shard M over 2 TCs
            vmem_limit_bytes=_VMEM_LIMIT),
        cost_estimate=pl.CostEstimate(flops=flops, transcendentals=0,
                                      bytes_accessed=bytes_accessed),
    )(w_stack, p_stack)


def conv2_maxmag_relu(w_stack, p_grouped, *, n_ch, npp, tmq):
    """Fused conv2 + MaxMagPool(2,2) + CReLU.

    p_grouped: (2K, 4*npp) bf16, lanes ordered (candidate, b, hp, wp) with each
    candidate group zero-padded to npp.  Returns (re, im), each (n_ch, npp) f32.
    """
    w_stack = w_stack.astype(jnp.bfloat16)
    p_grouped = p_grouped.astype(jnp.bfloat16)
    two_n, two_k = w_stack.shape
    assert two_n == 2 * n_ch
    assert p_grouped.shape == (two_k, 4 * npp)
    assert npp % tmq == 0 and tmq % _LANE == 0
    npb = npp // tmq
    in_specs = [pl.BlockSpec((two_n, two_k), lambda i: (0, 0))]   # weight: resident
    for j in range(4):                                            # 4 pooling candidates
        in_specs.append(pl.BlockSpec(
            (two_k, tmq), lambda i, _j=j, _npb=npb: (0, _j * _npb + i)))
    out_sd = jax.ShapeDtypeStruct((n_ch, npp), jnp.float32)
    flops = 2 * two_n * two_k * 4 * npp
    bytes_accessed = w_stack.size * 2 + p_grouped.size * 2 + 2 * n_ch * npp * 4
    return pl.pallas_call(
        _conv2_pool_relu_kernel,
        grid=(npb,),
        in_specs=in_specs,
        out_specs=(pl.BlockSpec((n_ch, tmq), lambda i: (0, i)),
                   pl.BlockSpec((n_ch, tmq), lambda i: (0, i))),
        out_shape=(out_sd, out_sd),
        compiler_params=pltpu.CompilerParams(
            dimension_semantics=("parallel",),
            vmem_limit_bytes=_VMEM_LIMIT),
        cost_estimate=pl.CostEstimate(flops=flops, transcendentals=0,
                                      bytes_accessed=bytes_accessed),
    )(w_stack, p_grouped, p_grouped, p_grouped, p_grouped)


def batchnorm_cmplx(re, im, *, true_n):
    """Per-channel split batch-norm over the (already pooled+ReLU'd) lane axis."""
    n_ch, npp = re.shape
    assert im.shape == (n_ch, npp)
    assert n_ch % 8 == 0, "channel tile must be sublane-aligned"
    assert npp % _LANE == 0
    # TODO(synk): for npp too large for one VMEM block, switch to a two-pass BN
    #             (lane-tiled partial sum/sum-sq accumulation, then normalize).
    tc = _choose_tc(n_ch)
    kernel = functools.partial(_bn_kernel, true_n=true_n)
    out_sd = jax.ShapeDtypeStruct((n_ch, npp), jnp.float32)
    return pl.pallas_call(
        kernel,
        grid=(n_ch // tc,),
        in_specs=[pl.BlockSpec((tc, npp), lambda c: (c, 0)),
                  pl.BlockSpec((tc, npp), lambda c: (c, 0))],
        out_specs=(pl.BlockSpec((tc, npp), lambda c: (c, 0)),
                   pl.BlockSpec((tc, npp), lambda c: (c, 0))),
        out_shape=(out_sd, out_sd),
        compiler_params=pltpu.CompilerParams(
            dimension_semantics=("parallel",),
            vmem_limit_bytes=_VMEM_LIMIT),
        cost_estimate=pl.CostEstimate(flops=12 * n_ch * npp,
                                      transcendentals=2 * n_ch,
                                      bytes_accessed=4 * n_ch * npp * 4),
    )(re, im)


# --------------------------- plain-JAX glue (setup) --------------------------

def make_gabor_bank(no_g, k, sigma=2.0, freq=0.5):
    """Deterministic complex Gabor filter bank, one orientation per g."""
    half = (k - 1) / 2.0
    coords = jnp.arange(k, dtype=jnp.float32) - half
    yy, xx = jnp.meshgrid(coords, coords, indexing="ij")
    thetas = jnp.arange(no_g, dtype=jnp.float32) * (jnp.pi / no_g)
    cos_t = jnp.cos(thetas)[:, None, None]
    sin_t = jnp.sin(thetas)[:, None, None]
    u = xx[None] * cos_t + yy[None] * sin_t
    v = -xx[None] * sin_t + yy[None] * cos_t
    env = jnp.exp(-(u * u + v * v) / (2.0 * sigma * sigma))
    g_re = env * jnp.cos(2.0 * jnp.pi * freq * u)
    g_im = env * jnp.sin(2.0 * jnp.pi * freq * u)
    return g_re.astype(jnp.float32), g_im.astype(jnp.float32)


def make_stacked_igconv_weight(w_re, w_im, no_g, k, k_pad):
    """Gabor-modulate a complex weight bank and build the stacked real matrix.

    w_re/w_im: (out_ch // no_g, in_ch, k, k) -> (2*out_ch, 2*k_pad) bf16,
    laid out [[Wre, -Wim], [Wim, Wre]]; per-component K columns ordered
    (in_ch, di, dj) and zero-padded from in_ch*k*k to k_pad."""
    g_re, g_im = make_gabor_bank(no_g, k)
    g_re = g_re[:, None, None]                       # (no_g, 1, 1, k, k)
    g_im = g_im[:, None, None]
    wm_re = w_re[None] * g_re - w_im[None] * g_im    # (no_g, out/no_g, in, k, k)
    wm_im = w_re[None] * g_im + w_im[None] * g_re
    out_ch = no_g * w_re.shape[0]
    kk = w_re.shape[1] * k * k
    a = wm_re.reshape(out_ch, kk)
    b = wm_im.reshape(out_ch, kk)
    if k_pad > kk:
        pad = ((0, 0), (0, k_pad - kk))
        a = jnp.pad(a, pad)
        b = jnp.pad(b, pad)
    w_stack = jnp.concatenate(
        [jnp.concatenate([a, -b], axis=1),
         jnp.concatenate([b, a], axis=1)], axis=0)   # (2*out_ch, 2*k_pad)
    return w_stack.astype(jnp.bfloat16)


def _pad_component_rows(p, k_eff, k_pad):
    """p: (2*k_eff, M) stacked [re; im] rows -> (2*k_pad, M): zero rows appended
    at the end of each component block (matches the zero weight columns)."""
    if k_pad == k_eff:
        return p
    m = p.shape[1]
    p3 = p.reshape(2, k_eff, m)
    p3 = jnp.pad(p3, ((0, 0), (0, k_pad - k_eff), (0, 0)))
    return p3.reshape(2 * k_pad, m)


def im2col_T(x_cm, k, pad):
    """x_cm: [C, B, H, W] channel-major -> [C*k*k, B*Ho*Wo].

    Rows ordered (c, di, dj); columns ordered (b, i, j)."""
    c, b, h, w = x_cm.shape
    if pad > 0:
        x_cm = jnp.pad(x_cm, ((0, 0), (0, 0), (pad, pad), (pad, pad)))
    ho = h + 2 * pad - k + 1
    wo = w + 2 * pad - k + 1
    slabs = [x_cm[:, :, di:di + ho, dj:dj + wo] for di in range(k) for dj in range(k)]
    p = jnp.stack(slabs, axis=1)                     # (C, k*k, B, Ho, Wo)
    return p.reshape(c * k * k, b * ho * wo), ho, wo


def im2col_T_pool_grouped(x_cm, k, pad, npp):
    """im2col for a conv whose output is immediately 2x2/2 max-pooled.

    Columns are ordered (pool-window candidate kh*2+kw, b, hp, wp); each of the 4
    candidate groups is zero-padded to `npp` lanes so the fused conv+pool kernel
    can address the candidates as block-aligned lane groups."""
    c, b, h, w = x_cm.shape
    xp = jnp.pad(x_cm, ((0, 0), (0, 0), (pad, pad), (pad, pad)))
    ho = h + 2 * pad - k + 1
    wo = w + 2 * pad - k + 1
    hp, wp = ho // 2, wo // 2
    per_tap = []
    for di in range(k):
        for dj in range(k):
            cands = [xp[:, :, kh + di::2, kw + dj::2][:, :, :hp, :wp]
                     for kh in range(2) for kw in range(2)]
            per_tap.append(jnp.stack(cands, axis=1))     # (C, 4, B, Hp, Wp)
    p = jnp.stack(per_tap, axis=1)                       # (C, k*k, 4, B, Hp, Wp)
    p = p.reshape(c * k * k, 4, b * hp * wp)
    n_real = b * hp * wp
    if npp > n_real:
        p = jnp.pad(p, ((0, 0), (0, 0), (0, npp - n_real)))
    return p.reshape(c * k * k, 4 * npp), hp, wp


def init_params(key, in_channels, out_channels, kernel_size, no_g):
    assert out_channels % no_g == 0

    def one(k_, cin, cout):
        k1, k2 = jax.random.split(k_)
        fan_in = cin * kernel_size * kernel_size
        scale = 1.0 / jnp.sqrt(fan_in)
        shape = (cout // no_g, cin, kernel_size, kernel_size)
        return {"w_re": jax.random.normal(k1, shape, jnp.float32) * scale,
                "w_im": jax.random.normal(k2, shape, jnp.float32) * scale}

    ka, kb = jax.random.split(key)
    return {"conv1": one(ka, in_channels, out_channels),
            "conv2": one(kb, out_channels, out_channels)}


def double_igconv_cmplx_forward(x_re, x_im, params, *, kernel_size, no_g):
    b, cin, h, w = x_re.shape
    k = kernel_size
    pad1 = k // 2 - 1                 # first IGConvCmplx
    pad2 = pad1 + 1                   # second IGConvCmplx (last=True)

    # channel-major complex stack (2*Cin, B, H, W), bf16 so patch bytes are halved.
    x0 = jnp.concatenate([x_re.transpose(1, 0, 2, 3),
                          x_im.transpose(1, 0, 2, 3)], axis=0).astype(jnp.bfloat16)

    # ---- conv 1: IGConvCmplx(Cin, Cout, k, padding=pad1, no_g), bf16 output ----
    kk1 = cin * k * k
    kk1_pad = _round_up(kk1, 8)       # 2K multiple of 16 -> unmasked bf16 sublane loads
    wstack1 = make_stacked_igconv_weight(params["conv1"]["w_re"],
                                         params["conv1"]["w_im"], no_g, k, kk1_pad)
    n1 = wstack1.shape[0] // 2
    p1, h1, w1 = im2col_T(x0, k, pad1)                    # (2*Cin*k*k, B*H1*W1)
    p1 = _pad_component_rows(p1, kk1, kk1_pad)
    m1 = b * h1 * w1
    tm1, m1_pad = _choose_tm(m1)
    p1 = jnp.pad(p1, ((0, 0), (0, m1_pad - m1)))
    o1 = stacked_cmplx_matmul(wstack1, p1, tm=tm1, out_dtype=jnp.bfloat16)
    # conv1 output stays channel-major; it IS conv2's (re; im)-stacked input.
    x1 = o1[:, :m1].reshape(2 * n1, b, h1, w1)

    # ---- conv 2 (padding = pad1+1) fused with MaxMagPool(2,2) + ReLUCmplx ----
    kk2 = n1 * k * k
    kk2_pad = _round_up(kk2, 8)
    wstack2 = make_stacked_igconv_weight(params["conv2"]["w_re"],
                                         params["conv2"]["w_im"], no_g, k, kk2_pad)
    n2 = wstack2.shape[0] // 2
    hp = (h1 + 2 * pad2 - k + 1) // 2
    wp = (w1 + 2 * pad2 - k + 1) // 2
    n_real = b * hp * wp
    npp = _round_up(n_real, _LANE)
    p2, hp, wp = im2col_T_pool_grouped(x1, k, pad2, npp)  # (2*N1*k*k, 4*Npp) bf16
    p2 = _pad_component_rows(p2, kk2, kk2_pad)
    tmq = _choose_tmq(npp)
    pooled_re, pooled_im = conv2_maxmag_relu(wstack2, p2, n_ch=n2, npp=npp, tmq=tmq)

    # ---- BatchNormCmplx on the pooled+ReLU'd maps ----
    r_re, r_im = batchnorm_cmplx(pooled_re, pooled_im, true_n=n_real)

    out_re = r_re[:, :n_real].reshape(n2, b, hp, wp).transpose(1, 0, 2, 3)
    out_im = r_im[:, :n_real].reshape(n2, b, hp, wp).transpose(1, 0, 2, 3)
    return out_re, out_im


# ---------------------------------- main ------------------------------------

if __name__ == "__main__":
    B, Cin, H, W = 2, 4, 16, 16
    Cout, kernel_size, no_g = 8, 3, 4

    key = jax.random.PRNGKey(0)
    kx1, kx2, kw = jax.random.split(key, 3)
    x_re = jax.random.normal(kx1, (B, Cin, H, W), dtype=jnp.float32)
    x_im = jax.random.normal(kx2, (B, Cin, H, W), dtype=jnp.float32)
    params = init_params(kw, Cin, Cout, kernel_size, no_g)

    fwd = jax.jit(lambda xr, xi: double_igconv_cmplx_forward(
        xr, xi, params, kernel_size=kernel_size, no_g=no_g))
    out_re, out_im = fwd(x_re, x_im)
    jax.block_until_ready((out_re, out_im))

    # conv1 (pad=0, k=3): 16->14; conv2 (pad=1, k=3): 14->14; pool 2x2: 14->7.
    assert out_re.shape == (B, Cout, 7, 7), out_re.shape
    assert out_im.shape == (B, Cout, 7, 7), out_im.shape
    assert bool(jnp.all(jnp.isfinite(out_re))) and bool(jnp.all(jnp.isfinite(out_im)))
    print("KERNEL_OK")
</pallas_src>

<mosaic_0001>
module attributes {stable_mosaic.version = 11 : i64} {
  func.func @_stacked_cmplx_matmul_kernel(%arg0: i32, %arg1: memref<16x80xbf16, #tpu.memory_space<vmem>>, %arg2: memref<80x256xbf16, #tpu.memory_space<vmem>>, %arg3: memref<16x256xbf16, #tpu.memory_space<vmem>>) attributes {dimension_semantics = [#tpu.dimension_semantics<parallel>], iteration_bounds = array<i64: 2>, scalar_prefetch = 0 : i64, scratch_operands = 0 : i64, tpu.core_type = #tpu.core_type<tc>, window_params = [{pipeline_mode = #tpu.pipeline_mode<synchronous>, transform_indices = @transform_0, window_bounds = array<i64: 16, 80>}, {transform_indices = @transform_1, window_bounds = array<i64: 80, 256>}, {transform_indices = @transform_2, window_bounds = array<i64: 16, 256>}]} {
    %c0 = arith.constant 0 : index
    %c0_0 = arith.constant 0 : index
    %0 = vector.load %arg1[%c0, %c0_0] : memref<16x80xbf16, #tpu.memory_space<vmem>>, vector<16x80xbf16>
    %c0_1 = arith.constant 0 : index
    %c0_2 = arith.constant 0 : index
    %1 = vector.load %arg2[%c0_1, %c0_2] : memref<80x256xbf16, #tpu.memory_space<vmem>>, vector<80x256xbf16>
    %cst = arith.constant dense<0.000000e+00> : vector<16x256xf32>
    %2 = tpu.matmul %0, %1, %cst {dimension_numbers = #tpu.dot_dimension_numbers<[1], [0], [0], [1], [0, 0, 1, 1], [], []>} : vector<16x80xbf16>, vector<80x256xbf16>, vector<16x256xf32> -> vector<16x256xf32>
    %3 = arith.truncf %2 : vector<16x256xf32> to vector<16x256xbf16>
    %c0_3 = arith.constant 0 : index
    %c0_4 = arith.constant 0 : index
    %4 = vector.load %arg3[%c0_3, %c0_4] : memref<16x256xbf16, #tpu.memory_space<vmem>>, vector<16x256xbf16>
    tpu.vector_store %arg3[%c0_3, %c0_4], %3 {strides = array<i32>} : memref<16x256xbf16, #tpu.memory_space<vmem>>, vector<16x256xbf16>,
    return
  }
  func.func @transform_0(%arg0: i32) -> (i32, i32) {
    %c0_i32 = arith.constant 0 : i32
    %c0_i32_0 = arith.constant 0 : i32
    %c0_i32_1 = arith.constant 0 : i32
    return %c0_i32, %c0_i32_0 : i32, i32
  }
  func.func @transform_1(%arg0: i32) -> (i32, i32) {
    %c0_i32 = arith.constant 0 : i32
    %c0_i32_0 = arith.constant 0 : i32
    return %c0_i32, %arg0 : i32, i32
  }
  func.func @transform_2(%arg0: i32) -> (i32, i32) {
    %c0_i32 = arith.constant 0 : i32
    %c0_i32_0 = arith.constant 0 : i32
    return %c0_i32, %arg0 : i32, i32
  }
}

module attributes {stable_mosaic.version = 11 : i64} {
  func.func @_conv2_pool_relu_kernel(%arg0: i32, %arg1: memref<16x144xbf16, #tpu.memory_space<vmem>>, %arg2: memref<144x128xbf16, #tpu.memory_space<vmem>>, %arg3: memref<144x128xbf16, #tpu.memory_space<vmem>>, %arg4: memref<144x128xbf16, #tpu.memory_space<vmem>>, %arg5: memref<144x128xbf16, #tpu.memory_space<vmem>>, %arg6: memref<8x128xf32, #tpu.memory_space<vmem>>, %arg7: memref<8x128xf32, #tpu.memory_space<vmem>>) attributes {dimension_semantics = [#tpu.dimension_semantics<parallel>], iteration_bounds = array<i64: 1>, scalar_prefetch = 0 : i64, scratch_operands = 0 : i64, tpu.core_type = #tpu.core_type<tc>, window_params = [{pipeline_mode = #tpu.pipeline_mode<synchronous>, transform_indices = @transform_0, window_bounds = array<i64: 16, 144>}, {transform_indices = @transform_1, window_bounds = array<i64: 144, 128>}, {transform_indices = @transform_2, window_bounds = array<i64: 144, 128>}, {transform_indices = @transform_3, window_bounds = array<i64: 144, 128>}, {transform_indices = @transform_4, window_bounds = array<i64: 144, 128>}, {transform_indices = @transform_5, window_bounds = array<i64: 8, 128>}, {transform_indices = @transform_6, window_bounds = array<i64: 8, 128>}]} {
    %c0 = arith.constant 0 : index
    %c0_0 = arith.constant 0 : index
    %0 = vector.load %arg1[%c0, %c0_0] : memref<16x144xbf16, #tpu.memory_space<vmem>>, vector<16x144xbf16>
    %c0_1 = arith.constant 0 : index
    %c0_2 = arith.constant 0 : index
    %1 = vector.load %arg2[%c0_1, %c0_2] : memref<144x128xbf16, #tpu.memory_space<vmem>>, vector<144x128xbf16>
    %cst = arith.constant dense<0.000000e+00> : vector<16x128xf32>
    %2 = tpu.matmul %0, %1, %cst {dimension_numbers = #tpu.dot_dimension_numbers<[1], [0], [0], [1], [0, 0, 1, 1], [], []>} : vector<16x144xbf16>, vector<144x128xbf16>, vector<16x128xf32> -> vector<16x128xf32>
    %3 = vector.extract_strided_slice %2 {offsets = [0, 0], sizes = [8, 128], strides = [1, 1]} : vector<16x128xf32> to vector<8x128xf32>
    %4 = vector.extract_strided_slice %2 {offsets = [8, 0], sizes = [8, 128], strides = [1, 1]} : vector<16x128xf32> to vector<8x128xf32>
    %5 = arith.mulf %3, %3 : vector<8x128xf32>
    %6 = arith.mulf %4, %4 : vector<8x128xf32>
    %7 = arith.addf %5, %6 : vector<8x128xf32>
    %c0_3 = arith.constant 0 : index
    %c0_4 = arith.constant 0 : index
    %8 = vector.load %arg1[%c0_3, %c0_4] : memref<16x144xbf16, #tpu.memory_space<vmem>>, vector<16x144xbf16>
    %c0_5 = arith.constant 0 : index
    %c0_6 = arith.constant 0 : index
    %9 = vector.load %arg3[%c0_5, %c0_6] : memref<144x128xbf16, #tpu.memory_space<vmem>>, vector<144x128xbf16>
    %cst_7 = arith.constant dense<0.000000e+00> : vector<16x128xf32>
    %10 = tpu.matmul %8, %9, %cst_7 {dimension_numbers = #tpu.dot_dimension_numbers<[1], [0], [0], [1], [0, 0, 1, 1], [], []>} : vector<16x144xbf16>, vector<144x128xbf16>, vector<16x128xf32> -> vector<16x128xf32>
    %11 = vector.extract_strided_slice %10 {offsets = [0, 0], sizes = [8, 128], strides = [1, 1]} : vector<16x128xf32> to vector<8x128xf32>
    %12 = vector.extract_strided_slice %10 {offsets = [8, 0], sizes = [8, 128], strides = [1, 1]} : vector<16x128xf32> to vector<8x128xf32>
    %13 = arith.mulf %11, %11 : vector<8x128xf32>
    %14 = arith.mulf %12, %12 : vector<8x128xf32>
    %15 = arith.addf %13, %14 : vector<8x128xf32>
    %16 = arith.cmpf ogt, %15, %7 : vector<8x128xf32>
    %17 = arith.select %16, %11, %3 : vector<8x128xi1>, vector<8x128xf32>
    %18 = arith.select %16, %12, %4 : vector<8x128xi1>, vector<8x128xf32>
    %19 = arith.select %16, %15, %7 : vector<8x128xi1>, vector<8x128xf32>
    %c0_8 = arith.constant 0 : index
    %c0_9 = arith.constant 0 : index
    %20 = vector.load %arg1[%c0_8, %c0_9] : memref<16x144xbf16, #tpu.memory_space<vmem>>, vector<16x144xbf16>
    %c0_10 = arith.constant 0 : index
    %c0_11 = arith.constant 0 : index
    %21 = vector.load %arg4[%c0_10, %c0_11] : memref<144x128xbf16, #tpu.memory_space<vmem>>, vector<144x128xbf16>
    %cst_12 = arith.constant dense<0.000000e+00> : vector<16x128xf32>
    %22 = tpu.matmul %20, %21, %cst_12 {dimension_numbers = #tpu.dot_dimension_numbers<[1], [0], [0], [1], [0, 0, 1, 1], [], []>} : vector<16x144xbf16>, vector<144x128xbf16>, vector<16x128xf32> -> vector<16x128xf32>
    %23 = vector.extract_strided_slice %22 {offsets = [0, 0], sizes = [8, 128], strides = [1, 1]} : vector<16x128xf32> to vector<8x128xf32>
    %24 = vector.extract_strided_slice %22 {offsets = [8, 0], sizes = [8, 128], strides = [1, 1]} : vector<16x128xf32> to vector<8x128xf32>
    %25 = arith.mulf %23, %23 : vector<8x128xf32>
    %26 = arith.mulf %24, %24 : vector<8x128xf32>
    %27 = arith.addf %25, %26 : vector<8x128xf32>
    %28 = arith.cmpf ogt, %27, %19 : vector<8x128xf32>
    %29 = arith.select %28, %23, %17 : vector<8x128xi1>, vector<8x128xf32>
    %30 = arith.select %28, %24, %18 : vector<8x128xi1>, vector<8x128xf32>
    %31 = arith.select %28, %27, %19 : vector<8x128xi1>, vector<8x128xf32>
    %c0_13 = arith.constant 0 : index
    %c0_14 = arith.constant 0 : index
    %32 = vector.load %arg1[%c0_13, %c0_14] : memref<16x144xbf16, #tpu.memory_space<vmem>>, vector<16x144xbf16>
    %c0_15 = arith.constant 0 : index
    %c0_16 = arith.constant 0 : index
    %33 = vector.load %arg5[%c0_15, %c0_16] : memref<144x128xbf16, #tpu.memory_space<vmem>>, vector<144x128xbf16>
    %cst_17 = arith.constant dense<0.000000e+00> : vector<16x128xf32>
    %34 = tpu.matmul %32, %33, %cst_17 {dimension_numbers = #tpu.dot_dimension_numbers<[1], [0], [0], [1], [0, 0, 1, 1], [], []>} : vector<16x144xbf16>, vector<144x128xbf16>, vector<16x128xf32> -> vector<16x128xf32>
    %35 = vector.extract_strided_slice %34 {offsets = [0, 0], sizes = [8, 128], strides = [1, 1]} : vector<16x128xf32> to vector<8x128xf32>
    %36 = vector.extract_strided_slice %34 {offsets = [8, 0], sizes = [8, 128], strides = [1, 1]} : vector<16x128xf32> to vector<8x128xf32>
    %37 = arith.mulf %35, %35 : vector<8x128xf32>
    %38 = arith.mulf %36, %36 : vector<8x128xf32>
    %39 = arith.addf %37, %38 : vector<8x128xf32>
    %40 = arith.cmpf ogt, %39, %31 : vector<8x128xf32>
    %41 = arith.select %40, %35, %29 : vector<8x128xi1>, vector<8x128xf32>
    %42 = arith.select %40, %36, %30 : vector<8x128xi1>, vector<8x128xf32>
    %cst_18 = arith.constant 0.000000e+00 : f32
    %43 = vector.broadcast %cst_18 : f32 to vector<8x128xf32>
    %44 = arith.maximumf %41, %43 : vector<8x128xf32>
    %c0_19 = arith.constant 0 : index
    %c0_20 = arith.constant 0 : index
    %45 = vector.load %arg6[%c0_19, %c0_20] : memref<8x128xf32, #tpu.memory_space<vmem>>, vector<8x128xf32>
    tpu.vector_store %arg6[%c0_19, %c0_20], %44 {strides = array<i32>} : memref<8x128xf32, #tpu.memory_space<vmem>>, vector<8x128xf32>,
    %cst_21 = arith.constant 0.000000e+00 : f32
    %46 = vector.broadcast %cst_21 : f32 to vector<8x128xf32>
    %47 = arith.maximumf %42, %46 : vector<8x128xf32>
    %c0_22 = arith.constant 0 : index
    %c0_23 = arith.constant 0 : index
    %48 = vector.load %arg7[%c0_22, %c0_23] : memref<8x128xf32, #tpu.memory_space<vmem>>, vector<8x128xf32>
    tpu.vector_store %arg7[%c0_22, %c0_23], %47 {strides = array<i32>} : memref<8x128xf32, #tpu.memory_space<vmem>>, vector<8x128xf32>,
    return
  }
  func.func @transform_0(%arg0: i32) -> (i32, i32) {
    %c0_i32 = arith.constant 0 : i32
    %c0_i32_0 = arith.constant 0 : i32
    %c0_i32_1 = arith.constant 0 : i32
    return %c0_i32, %c0_i32_0 : i32, i32
  }
  func.func @transform_1(%arg0: i32) -> (i32, i32) {
    %c0_i32 = arith.constant 0 : i32
    %0 = arith.addi %c0_i32, %arg0 : i32
    %c0_i32_0 = arith.constant 0 : i32
    %c0_i32_1 = arith.constant 0 : i32
    return %c0_i32_0, %0 : i32, i32
  }
  func.func @transform_2(%arg0: i32) -> (i32, i32) {
    %c1_i32 = arith.constant 1 : i32
    %0 = arith.addi %c1_i32, %arg0 : i32
    %c0_i32 = arith.constant 0 : i32
    %c0_i32_0 = arith.constant 0 : i32
    return %c0_i32, %0 : i32, i32
  }
  func.func @transform_3(%arg0: i32) -> (i32, i32) {
    %c2_i32 = arith.constant 2 : i32
    %0 = arith.addi %c2_i32, %arg0 : i32
    %c0_i32 = arith.constant 0 : i32
    %c0_i32_0 = arith.constant 0 : i32
    return %c0_i32, %0 : i32, i32
  }
  func.func @transform_4(%arg0: i32) -> (i32, i32) {
    %c3_i32 = arith.constant 3 : i32
    %0 = arith.addi %c3_i32, %arg0 : i32
    %c0_i32 = arith.constant 0 : i32
    %c0_i32_0 = arith.constant 0 : i32
    return %c0_i32, %0 : i32, i32
  }
  func.func @transform_5(%arg0: i32) -> (i32, i32) {
    %c0_i32 = arith.constant 0 : i32
    %c0_i32_0 = arith.constant 0 : i32
    return %c0_i32, %arg0 : i32, i32
  }
  func.func @transform_6(%arg0: i32) -> (i32, i32) {
    %c0_i32 = arith.constant 0 : i32
    %c0_i32_0 = arith.constant 0 : i32
    return %c0_i32, %arg0 : i32, i32
  }
}

module attributes {stable_mosaic.version = 11 : i64} {
  func.func @_bn_kernel(%arg0: i32, %arg1: memref<8x128xf32, #tpu.memory_space<vmem>>, %arg2: memref<8x128xf32, #tpu.memory_space<vmem>>, %arg3: memref<8x128xf32, #tpu.memory_space<vmem>>, %arg4: memref<8x128xf32, #tpu.memory_space<vmem>>) attributes {dimension_semantics = [#tpu.dimension_semantics<parallel>], iteration_bounds = array<i64: 1>, scalar_prefetch = 0 : i64, scratch_operands = 0 : i64, tpu.core_type = #tpu.core_type<tc>, window_params = [{transform_indices = @transform_0, window_bounds = array<i64: 8, 128>}, {transform_indices = @transform_1, window_bounds = array<i64: 8, 128>}, {transform_indices = @transform_2, window_bounds = array<i64: 8, 128>}, {transform_indices = @transform_3, window_bounds = array<i64: 8, 128>}]} {
    %0 = tpu.iota {dimensions = array<i32: 1>} : vector<8x128xi32>
    %c98_i32 = arith.constant 98 : i32
    %1 = vector.broadcast %c98_i32 : i32 to vector<8x128xi32>
    %2 = arith.cmpi slt, %0, %1 : vector<8x128xi32>
    %c0 = arith.constant 0 : index
    %c0_0 = arith.constant 0 : index
    %3 = vector.load %arg1[%c0, %c0_0] : memref<8x128xf32, #tpu.memory_space<vmem>>, vector<8x128xf32>
    %cst = arith.constant dense<0.000000e+00> : vector<8xf32>
    %4 = vector.multi_reduction <add>, %3, %cst [1] : vector<8x128xf32> to vector<8xf32>
    %5 = vector.shape_cast %4 : vector<8xf32> to vector<8x1xf32>
    %cst_1 = arith.constant 0.0102040814 : f32
    %6 = vector.broadcast %cst_1 : f32 to vector<8x1xf32>
    %7 = arith.mulf %5, %6 : vector<8x1xf32>
    %8 = vector.broadcast %7 : vector<8x1xf32> to vector<8x128xf32>
    %9 = arith.subf %3, %8 : vector<8x128xf32>
    %cst_2 = arith.constant 0.000000e+00 : f32
    %10 = vector.broadcast %cst_2 : f32 to vector<8x128xf32>
    %11 = arith.select %2, %9, %10 : vector<8x128xi1>, vector<8x128xf32>
    %12 = arith.mulf %11, %11 : vector<8x128xf32>
    %cst_3 = arith.constant dense<0.000000e+00> : vector<8xf32>
    %13 = vector.multi_reduction <add>, %12, %cst_3 [1] : vector<8x128xf32> to vector<8xf32>
    %14 = vector.shape_cast %13 : vector<8xf32> to vector<8x1xf32>
    %cst_4 = arith.constant 0.0102040814 : f32
    %15 = vector.broadcast %cst_4 : f32 to vector<8x1xf32>
    %16 = arith.mulf %14, %15 : vector<8x1xf32>
    %cst_5 = arith.constant 9.99999974E-6 : f32
    %17 = vector.broadcast %cst_5 : f32 to vector<8x1xf32>
    %18 = arith.addf %16, %17 : vector<8x1xf32>
    %19 = math.rsqrt %18 : vector<8x1xf32>
    %20 = vector.broadcast %19 : vector<8x1xf32> to vector<8x128xf32>
    %21 = arith.mulf %11, %20 : vector<8x128xf32>
    %c0_6 = arith.constant 0 : index
    %c0_7 = arith.constant 0 : index
    %22 = vector.load %arg3[%c0_6, %c0_7] : memref<8x128xf32, #tpu.memory_space<vmem>>, vector<8x128xf32>
    tpu.vector_store %arg3[%c0_6, %c0_7], %21 {strides = array<i32>} : memref<8x128xf32, #tpu.memory_space<vmem>>, vector<8x128xf32>,
    %c0_8 = arith.constant 0 : index
    %c0_9 = arith.constant 0 : index
    %23 = vector.load %arg2[%c0_8, %c0_9] : memref<8x128xf32, #tpu.memory_space<vmem>>, vector<8x128xf32>
    %cst_10 = arith.constant dense<0.000000e+00> : vector<8xf32>
    %24 = vector.multi_reduction <add>, %23, %cst_10 [1] : vector<8x128xf32> to vector<8xf32>
    %25 = vector.shape_cast %24 : vector<8xf32> to vector<8x1xf32>
    %cst_11 = arith.constant 0.0102040814 : f32
    %26 = vector.broadcast %cst_11 : f32 to vector<8x1xf32>
    %27 = arith.mulf %25, %26 : vector<8x1xf32>
    %28 = vector.broadcast %27 : vector<8x1xf32> to vector<8x128xf32>
    %29 = arith.subf %23, %28 : vector<8x128xf32>
    %cst_12 = arith.constant 0.000000e+00 : f32
    %30 = vector.broadcast %cst_12 : f32 to vector<8x128xf32>
    %31 = arith.select %2, %29, %30 : vector<8x128xi1>, vector<8x128xf32>
    %32 = arith.mulf %31, %31 : vector<8x128xf32>
    %cst_13 = arith.constant dense<0.000000e+00> : vector<8xf32>
    %33 = vector.multi_reduction <add>, %32, %cst_13 [1] : vector<8x128xf32> to vector<8xf32>
    %34 = vector.shape_cast %33 : vector<8xf32> to vector<8x1xf32>
    %cst_14 = arith.constant 0.0102040814 : f32
    %35 = vector.broadcast %cst_14 : f32 to vector<8x1xf32>
    %36 = arith.mulf %34, %35 : vector<8x1xf32>
    %cst_15 = arith.constant 9.99999974E-6 : f32
    %37 = vector.broadcast %cst_15 : f32 to vector<8x1xf32>
    %38 = arith.addf %36, %37 : vector<8x1xf32>
    %39 = math.rsqrt %38 : vector<8x1xf32>
    %40 = vector.broadcast %39 : vector<8x1xf32> to vector<8x128xf32>
    %41 = arith.mulf %31, %40 : vector<8x128xf32>
    %c0_16 = arith.constant 0 : index
    %c0_17 = arith.constant 0 : index
    %42 = vector.load %arg4[%c0_16, %c0_17] : memref<8x128xf32, #tpu.memory_space<vmem>>, vector<8x128xf32>
    tpu.vector_store %arg4[%c0_16, %c0_17], %41 {strides = array<i32>} : memref<8x128xf32, #tpu.memory_space<vmem>>, vector<8x128xf32>,
    return
  }
  func.func @transform_0(%arg0: i32) -> (i32, i32) {
    %c0_i32 = arith.constant 0 : i32
    %c0_i32_0 = arith.constant 0 : i32
    return %arg0, %c0_i32 : i32, i32
  }
  func.func @transform_1(%arg0: i32) -> (i32, i32) {
    %c0_i32 = arith.constant 0 : i32
    %c0_i32_0 = arith.constant 0 : i32
    return %arg0, %c0_i32 : i32, i32
  }
  func.func @transform_2(%arg0: i32) -> (i32, i32) {
    %c0_i32 = arith.constant 0 : i32
    %c0_i32_0 = arith.constant 0 : i32
    return %arg0, %c0_i32 : i32, i32
  }
  func.func @transform_3(%arg0: i32) -> (i32, i32) {
    %c0_i32 = arith.constant 0 : i32
    %c0_i32_0 = arith.constant 0 : i32
    return %arg0, %c0_i32 : i32, i32
  }
}

</mosaic_0001>

<llo_original>
// kernel: _lambda_.3
$region0: #{_lambda_.3}
  #allocation0 [shape = 'u32[]', space=smem, size = 0x4, offset = 0x4, fixed_abs, tag = 'smem constant byte address 0x4 - core index']
  #allocation1 [shape = 'u32[144,128]{1,0:T(1,128)}', space=vmem, size = 0x12000, scoped, tag = 'internal scratch']
  %s0 = inlined_call_operand.vmem [shape: bf16[16,80], index: 0, kind: input, shape index: {}]
  %s1 = inlined_call_operand.vmem [shape: bf16[80,512], index: 1, kind: input, shape index: {}]
  %s2 = inlined_call_operand.vmem [shape: bf16[16,512], index: 2, kind: output, shape index: {}]
  %s3 = sld [smem:[#allocation0]]
  $region113: #{_lambda_.3} parent=0
    _
  %s5 = ssub.s32 1, %s3
  %s6 = scalar_select 0, %s5, %s3
  $region1: #{_lambda_.3} parent=0
    #allocation2 [shape = 'u8[81920]{0}', space=vmem, size = 0x14000, scoped, tag = 'input window, operand 1']
    #allocation3 [shape = 'u8[16384]{0}', space=vmem, size = 0x4000, scoped, tag = 'output window, operand 0']
    loop: start=0, step=1, limit=4
    $region2: #{_lambda_.3} parent=1 // loop_pre_header
      _
    $region3: #{_lambda_.3} parent=1 // loop_header
      %s8 = sphi 0, %s12
      %p9 = scmp.ge.s32.totalorder %s8, 4
      %s16 = sphi 0, %s16
      %s18 = sphi 0, %s16
      %s19 = sphi 0, %s18
      %s33 = sphi 0, %s19
      %s39 = sphi 0, %s41
      %s42 = sphi 0, %s39
      %s43 = sphi 0, %s42
      %s59 = sphi 0, %s43
      %s65 = sphi 0, %s67
      %s68 = sphi 0, %s65
      %s69 = sphi 0, %s68
      %s85 = sphi 0, %s69
    $region4: #{_lambda_.3} parent=1 // loop_header_branch
      %11 = sbr.rel (%p9) target = $region8
    $region5: #{_lambda_.3} parent=1 // loop_body
      %s13 = ssub.s32 %s8, 1
      %s14 = ssub.s32 %s8, 2
      %s15 = sadd.s32 %s8, 1
      %s17 = sadd.s32 %s16, 1
      %p20 = scmp.eq.s32.totalorder %s8, 1
      %p21 = scmp.ne.s32.totalorder %s16, %s18
      %p22 = scmp.eq.s32.totalorder %s8, 0
      %p23 = por %p21, %p22
      %p24 = scmp.ne.s32.totalorder %s16, %s18
      %p25 = scmp.eq.s32.totalorder %s13, 1
      %p26 = por %p24, %p25
      %p27 = scmp.ne.s32.totalorder %s18, %s19
      %p28 = scmp.eq.s32.totalorder %s13, 0
      %p29 = por %p27, %p28
      %p30 = scmp.ne.s32.totalorder %s18, %s19
      %p31 = scmp.eq.s32.totalorder %s14, 1
      %p32 = por %p30, %p31
      %p34 = scmp.ne.s32.totalorder %s19, %s33
      %p35 = scmp.eq.s32.totalorder %s14, 0
      %p36 = por %p34, %p35
      %s37 = ssub.s32 %s8, %s15
      %p38 = scmp.eq.s32.totalorder %s37, 0
      %s40 = sadd.s32 %s39, 1
      %s41 = scalar_select %p38, %s39, %s40
      %p44 = pneg %p38
      %p45 = scmp.eq.s32.totalorder %s8, 1
      %p46 = por %p44, %p45
      %p47 = scmp.ne.s32.totalorder %s39, %s42
      %p48 = scmp.eq.s32.totalorder %s8, 0
      %p49 = por %p47, %p48
      %p50 = scmp.ne.s32.totalorder %s39, %s42
      %p51 = scmp.eq.s32.totalorder %s13, 1
      %p52 = por %p50, %p51
      %p53 = scmp.ne.s32.totalorder %s42, %s43
      %p54 = scmp.eq.s32.totalorder %s13, 0
      %p55 = por %p53, %p54
      %p56 = scmp.ne.s32.totalorder %s42, %s43
      %p57 = scmp.eq.s32.totalorder %s14, 1
      %p58 = por %p56, %p57
      %p60 = scmp.ne.s32.totalorder %s43, %s59
      %p61 = scmp.eq.s32.totalorder %s14, 0
      %p62 = por %p60, %p61
      %s63 = ssub.s32 %s8, %s15
      %p64 = scmp.eq.s32.totalorder %s63, 0
      %s66 = sadd.s32 %s65, 1
      %s67 = scalar_select %p64, %s65, %s66
      %p70 = pneg %p64
      %p71 = scmp.eq.s32.totalorder %s8, 1
      %p72 = por %p70, %p71
      %p73 = scmp.ne.s32.totalorder %s65, %s68
      %p74 = scmp.eq.s32.totalorder %s8, 0
      %p75 = por %p73, %p74
      %p76 = scmp.ne.s32.totalorder %s65, %s68
      %p77 = scmp.eq.s32.totalorder %s13, 1
      %p78 = por %p76, %p77
      %p79 = scmp.ne.s32.totalorder %s68, %s69
      %p80 = scmp.eq.s32.totalorder %s13, 0
      %p81 = por %p79, %p80
      %p82 = scmp.ne.s32.totalorder %s68, %s69
      %p83 = scmp.eq.s32.totalorder %s14, 1
      %p84 = por %p82, %p83
      %p86 = scmp.ne.s32.totalorder %s69, %s85
      %p87 = scmp.eq.s32.totalorder %s14, 0
      %p88 = por %p86, %p87
      %p89 = scmp.le.s32.totalorder 1, %s8
      %p90 = scmp.lt.s32.totalorder %s8, 3
      %p91 = pnand %p89, %p90
      %p92 = pneg %p91
      // Predicated region
      $region9: #{_lambda_.3} parent=5 // pred_check
        _
      $region10: #{_lambda_.3} parent=5 // pred_check_branch
        %94 = sbr.rel (%p91) target = $region12
      $region11: #{_lambda_.3} parent=5 // pred_region
        %s95 = ssub.s32 %s8, 1
        // Predicated region
        $region13: #{_lambda_.3} parent=11 // pred_check
          %p96 = pneg %p29
        $region14: #{_lambda_.3} parent=11 // pred_check_branch
          %98 = sbr.rel (%p96) target = $region16
        $region15: #{_lambda_.3} parent=11 // pred_region
          _
        $region16: #{_lambda_.3} parent=11 // pred_fallthru
          _
      $region12: #{_lambda_.3} parent=5 // pred_fallthru
        _
      %p99 = scmp.lt.s32.totalorder %s8, 2
      // Predicated region
      $region17: #{_lambda_.3} parent=5 // pred_check
        %p100 = pneg %p99
      $region18: #{_lambda_.3} parent=5 // pred_check_branch
        %102 = sbr.rel (%p100) target = $region20
      $region19: #{_lambda_.3} parent=5 // pred_region
        // Predicated region
        $region21: #{_lambda_.3} parent=19 // pred_check
          %p103 = pneg %p49
        $region22: #{_lambda_.3} parent=19 // pred_check_branch
          %105 = sbr.rel (%p103) target = $region24
        $region23: #{_lambda_.3} parent=19 // pred_region
          %s106 = sand.u32 %s39, 1
          %s107 = sand.u32 %s39, 1
          %s108 = smul.addr %s107, 80
          %s109 = scalar_lea.vmem [#allocation2], %s108
          %s110 = smul.u32 2, %s8
          %s111 = smul.addr %s110, 4
          %s112 = scalar_lea.vmem %s1, %s111
          // Predicated region
          $region25: #{_lambda_.3} parent=23 // pred_check
            _
          $region26: #{_lambda_.3} parent=23 // pred_check_branch
            %114 = sbr.rel (0) target = $region28
          $region27: #{_lambda_.3} parent=23 // pred_region
            // Predicated region
            $region29: #{_lambda_.3} parent=27 // pred_check
              _
            $region30: #{_lambda_.3} parent=27 // pred_check_branch
              %116 = sbr.rel (0) target = $region32
            $region31: #{_lambda_.3} parent=27 // pred_region
              // Predicated region
              $region44: #{_lambda_.3} parent=31 // pred_check
                _
              $region45: #{_lambda_.3} parent=31 // pred_check_branch
                %149 = sbr.rel (0) target = $region47
              $region46: #{_lambda_.3} parent=31 // pred_region
                loop: start=0, step=1, limit=1
                $region48: #{_lambda_.3} parent=46 // loop_pre_header
                  _
                $region49: #{_lambda_.3} parent=46 // loop_header
                  %s151 = sphi 0, %s155
                  %p152 = scmp.ge.s32.totalorder %s151, 1
                  %s156 = sphi %s112, %s112
                  %s157 = sphi %s109, %s109
                $region50: #{_lambda_.3} parent=46 // loop_header_branch
                  %154 = sbr.rel (%p152) target = $region54
                $region51: #{_lambda_.3} parent=46 // loop_body
                  %v158 = vld [vmem:[%s156] sm:$0xff]
                  %159 = vst [vmem:[%s157] sm:$0xff] %v158
                  %v160 = vld [vmem:[%s156 + $0x10] sm:$0xff]
                  %161 = vst [vmem:[%s157 + $0x8] sm:$0xff] %v160
                  %v162 = vld [vmem:[%s156 + $0x20] sm:$0xff]
                  %163 = vst [vmem:[%s157 + $0x10] sm:$0xff] %v162
                  %v164 = vld [vmem:[%s156 + $0x30] sm:$0xff]
                  %165 = vst [vmem:[%s157 + $0x18] sm:$0xff] %v164
                  %v166 = vld [vmem:[%s156 + $0x40] sm:$0xff]
                  %167 = vst [vmem:[%s157 + $0x20] sm:$0xff] %v166
                  %v168 = vld [vmem:[%s156 + $0x50] sm:$0xff]
                  %169 = vst [vmem:[%s157 + $0x28] sm:$0xff] %v168
                  %v170 = vld [vmem:[%s156 + $0x60] sm:$0xff]
                  %171 = vst [vmem:[%s157 + $0x30] sm:$0xff] %v170
                  %v172 = vld [vmem:[%s156 + $0x70] sm:$0xff]
                  %173 = vst [vmem:[%s157 + $0x38] sm:$0xff] %v172
                  %v174 = vld [vmem:[%s156 + $0x80] sm:$0xff]
                  %175 = vst [vmem:[%s157 + $0x40] sm:$0xff] %v174
                  %v176 = vld [vmem:[%s156 + $0x90] sm:$0xff]
                  %177 = vst [vmem:[%s157 + $0x48] sm:$0xff] %v176
                $region52: #{_lambda_.3} parent=46 // loop_footer
                  %s155 = sadd.s32 1, %s151
                $region53: #{_lambda_.3} parent=46 // loop_footer_branch
                  %150 = sbr.rel target = $region49
                $region54: #{_lambda_.3} parent=46 // loop_exit
                  _
              $region47: #{_lambda_.3} parent=31 // pred_fallthru
                _
              // Predicated region
              $region55: #{_lambda_.3} parent=31 // pred_check
                _
              $region56: #{_lambda_.3} parent=31 // pred_check_branch
                %179 = sbr.rel target = $region58
              $region57: #{_lambda_.3} parent=31 // pred_region
                _
              $region58: #{_lambda_.3} parent=31 // pred_fallthru
                _
            $region32: #{_lambda_.3} parent=27 // pred_fallthru
              _
            // Predicated region
            $region33: #{_lambda_.3} parent=27 // pred_check
              _
            $region34: #{_lambda_.3} parent=27 // pred_check_branch
              %118 = sbr.rel target = $region36
            $region35: #{_lambda_.3} parent=27 // pred_region
              loop: start=0, step=1, limit=1
              $region37: #{_lambda_.3} parent=35 // loop_pre_header
                _
              $region38: #{_lambda_.3} parent=35 // loop_header
                %s121 = sphi 0, %s125
                %p122 = scmp.ge.s32.totalorder %s121, 1
                %s126 = sphi %s112, %s112
                %s127 = sphi %s109, %s109
              $region39: #{_lambda_.3} parent=35 // loop_header_branch
                %124 = sbr.rel (%p122) target = $region43
              $region40: #{_lambda_.3} parent=35 // loop_body
                %v128 = vld [vmem:[%s126] sm:$0xff]
                %129 = vst [vmem:[%s127] sm:$0xff] %v128
                %v130 = vld [vmem:[%s126 + $0x10] sm:$0xff]
                %131 = vst [vmem:[%s127 + $0x8] sm:$0xff] %v130
                %v132 = vld [vmem:[%s126 + $0x20] sm:$0xff]
                %133 = vst [vmem:[%s127 + $0x10] sm:$0xff] %v132
                %v134 = vld [vmem:[%s126 + $0x30] sm:$0xff]
                %135 = vst [vmem:[%s127 + $0x18] sm:$0xff] %v134
                %v136 = vld [vmem:[%s126 + $0x40] sm:$0xff]
                %137 = vst [vmem:[%s127 + $0x20] sm:$0xff] %v136
                %v138 = vld [vmem:[%s126 + $0x50] sm:$0xff]
                %139 = vst [vmem:[%s127 + $0x28] sm:$0xff] %v138
                %v140 = vld [vmem:[%s126 + $0x60] sm:$0xff]
                %141 = vst [vmem:[%s127 + $0x30] sm:$0xff] %v140
                %v142 = vld [vmem:[%s126 + $0x70] sm:$0xff]
                %143 = vst [vmem:[%s127 + $0x38] sm:$0xff] %v142
                %v144 = vld [vmem:[%s126 + $0x80] sm:$0xff]
                %145 = vst [vmem:[%s127 + $0x40] sm:$0xff] %v144
                %v146 = vld [vmem:[%s126 + $0x90] sm:$0xff]
                %147 = vst [vmem:[%s127 + $0x48] sm:$0xff] %v146
              $region41: #{_lambda_.3} parent=35 // loop_footer
                %s125 = sadd.s32 1, %s121
              $region42: #{_lambda_.3} parent=35 // loop_footer_branch
                %120 = sbr.rel target = $region38
              $region43: #{_lambda_.3} parent=35 // loop_exit
                _
            $region36: #{_lambda_.3} parent=27 // pred_fallthru
              _
          $region28: #{_lambda_.3} parent=23 // pred_fallthru
            _
          %180 = vnop
        $region24: #{_lambda_.3} parent=19 // pred_fallthru
          _
      $region20: #{_lambda_.3} parent=5 // pred_fallthru
        _
      %p181 = scmp.le.s32.totalorder 1, %s8
      %p182 = scmp.lt.s32.totalorder %s8, 3
      %p183 = pnand %p181, %p182
      %p184 = pneg %p183
      // Predicated region
      $region59: #{_lambda_.3} parent=5 // pred_check
        _
      $region60: #{_lambda_.3} parent=5 // pred_check_branch
        %186 = sbr.rel (%p183) target = $region62
      $region61: #{_lambda_.3} parent=5 // pred_region
        %s187 = ssub.s32 %s8, 1
        %s188 = sand.u32 %s42, 1
        %s189 = sand.u32 %s42, 1
        %s190 = smul.addr %s189, 80
        %s191 = scalar_lea.vmem [#allocation2], %s190
        // Predicated region
        $region63: #{_lambda_.3} parent=61 // pred_check
          %p192 = pneg %p55
        $region64: #{_lambda_.3} parent=61 // pred_check_branch
          %194 = sbr.rel (%p192) target = $region66
        $region65: #{_lambda_.3} parent=61 // pred_region
          _
        $region66: #{_lambda_.3} parent=61 // pred_fallthru
          _
        %p195 = pneg %p29
        %p196 = pneg %p26
        %s197 = sand.u32 %s42, 1
        %s198 = sand.u32 %s42, 1
        %s199 = smul.addr %s198, 80
        %s200 = scalar_lea.vmem [#allocation2], %s199
        %p201 = pneg %p55
        %p202 = pneg %p52
        %p203 = pneg %p81
        %p204 = pneg %p78
        %s205 = sand.u32 %s68, 1
        %s206 = sand.u32 %s68, 1
        %s207 = smul.addr %s206, 16
        %s208 = scalar_lea.vmem [#allocation3], %s207
        %s209 = smul.u32 2, %s13
        %s210 = smul.u32 2, %s13
        %v212 = vld [vmem:[%s0] sm:$0xf]
        %v213 = vld [vmem:[%s0 + $0x4] sm:$0xf]
        %v214 = vld [vmem:[%s191] sm:$0xff]
        %v215 = vld [vmem:[%s191 + $0x8] sm:$0xff]
        %v216 = vld [vmem:[%s191 + $0x10] sm:$0xff]
        %v217 = vld [vmem:[%s191 + $0x18] sm:$0xff]
        %v218 = vld [vmem:[%s191 + $0x20] sm:$0xff]
        %v219 = vld [vmem:[%s191 + $0x28] sm:$0xff]
        %v220 = vld [vmem:[%s191 + $0x30] sm:$0xff]
        %v221 = vld [vmem:[%s191 + $0x38] sm:$0xff]
        %v222 = vld [vmem:[%s191 + $0x40] sm:$0xff]
        %v223 = vld [vmem:[%s191 + $0x48] sm:$0xff]
        %v226 = vunpack.c.l.b16 %v212
        %v227 = vunpack.c.l.b16 %v213
        %v228 = vpack.c.b16 %v227, %v226
        %v239 = vunpack.c.l.b16 %v214
        %v240 = vunpack.c.h.b16 %v214
        %v241 = vunpack.c.l.b16 %v215
        %v242 = vunpack.c.h.b16 %v215
        %v243 = vunpack.c.l.b16 %v216
        %v244 = vunpack.c.h.b16 %v216
        %v245 = vunpack.c.l.b16 %v217
        %v246 = vunpack.c.h.b16 %v217
        %v247 = vunpack.c.l.b16 %v218
        %v248 = vunpack.c.h.b16 %v218
        %v249 = vunpack.c.l.b16 %v219
        %v250 = vunpack.c.h.b16 %v219
        %v251 = vunpack.c.l.b16 %v220
        %v252 = vunpack.c.h.b16 %v220
        %v253 = vunpack.c.l.b16 %v221
        %v254 = vunpack.c.h.b16 %v221
        %v255 = vunpack.c.l.b16 %v222
        %v256 = vunpack.c.h.b16 %v222
        %v257 = vunpack.c.l.b16 %v223
        %v258 = vunpack.c.h.b16 %v223
        %v259 = vpack.c.b16 %v241, %v239
        %v260 = vpack.c.b16 %v242, %v240
        %v261 = vpack.c.b16 %v245, %v243
        %v262 = vpack.c.b16 %v246, %v244
        %v263 = vpack.c.b16 %v249, %v247
        %v264 = vpack.c.b16 %v250, %v248
        %v265 = vpack.c.b16 %v253, %v251
        %v266 = vpack.c.b16 %v254, %v252
        %v267 = vpack.c.b16 %v257, %v255
        %v268 = vpack.c.b16 %v258, %v256
        %vm279 = vcmask 654336
        %v281 = vsel %vm279, %v228, 0
        %283 = vmatprep.subr.bf16.mxu0 %v260
        %284 = vmatpush1.bf16.msra.mxu0 %v259
        %285 = vmatprep.subr.bf16.mxu0 %v262
        %286 = vmatpush1.bf16.msra.mxu0 %v261
        %287 = vmatprep.subr.bf16.mxu0 %v264
        %288 = vmatpush1.bf16.msra.mxu0 %v263
        %289 = vmatprep.subr.bf16.mxu0 %v266
        %290 = vmatpush1.bf16.msra.mxu0 %v265
        %291 = vmatprep.subr.bf16.mxu0 %v268
        %292 = vmatpush1.bf16.msra.mxu0 %v267
        %293 = vmatprep.subr.bf16.mxu0 0
        %294 = vmatpush1.bf16.msra.mxu0 0
        %295 = vmatprep.subr.bf16.mxu0 0
        %296 = vmatpush1.bf16.msra.mxu0 0
        %297 = vmatprep.subr.bf16.mxu0 0
        %298 = vmatpush1.bf16.msra.mxu0 0
        %299 = vmatprep.subr.bf16.mxu0 0
        %300 = vmatpush1.bf16.msra.mxu0 0
        %301 = vmatprep.subr.bf16.mxu0 0
        %302 = vmatpush1.bf16.msra.mxu0 0
        %303 = vmatprep.subr.bf16.mxu0 0
        %304 = vmatpush1.bf16.msra.mxu0 0
        %305 = vmatprep.subr.bf16.mxu0 0
        %306 = vmatpush1.bf16.msra.mxu0 0
        %307 = vmatprep.subr.bf16.mxu0 0
        %308 = vmatpush1.bf16.msra.mxu0 0
        %309 = vmatprep.subr.bf16.mxu0 0
        %310 = vmatpush1.bf16.msra.mxu0 0
        %311 = vmatprep.subr.bf16.mxu0 0
        %312 = vmatpush1.bf16.msra.mxu0 0
        %313 = vmatprep.subr.bf16.mxu0 0
        %314 = vmatpush1.bf16.msra.mxu0 0
        %315 = vmatprep.mubr.bf16.mxu0 0
        %316 = vmatmul.mubr.bf16.gmra.mrb[0].mxu0 %v281
        %v317 = vpop.f32.mrb[0].mxu0
        %v318 = vadd.f32 0.0, %v317
        %v319 = vpop.f32.mrb[0].mxu0
        %v320 = vadd.f32 0.0, %v319
        %v321 = vpop.f32.mrb[0].mxu0
        %v322 = vadd.f32 0.0, %v321
        %v323 = vpop.f32.mrb[0].mxu0
        %v324 = vadd.f32 0.0, %v323
        %325 = vdwg.mxu0
        %v326 = vpack.c.bf16 %v322, %v318
        %v327 = vpack.c.bf16 %v324, %v320
        %v330 = vunpack.c.l.b16 %v326
        %v331 = vunpack.c.l.b16 %v327
        %v332 = vunpack.c.h.b16 %v326
        %v333 = vunpack.c.h.b16 %v327
        %v334 = vpack.c.b16 %v331, %v330
        %v335 = vpack.c.b16 %v333, %v332
        %338 = vst [vmem:[%s208] sm:$0xff] %v334
        %339 = vst [vmem:[%s208 + $0x8] sm:$0xff] %v335
        %s340 = sand.u32 %s68, 1
        %s341 = sand.u32 %s68, 1
        %s342 = smul.addr %s341, 16
        %s343 = scalar_lea.vmem [#allocation3], %s342
        // Predicated region
        $region67: #{_lambda_.3} parent=61 // pred_check
          %p344 = pneg %p78
        $region68: #{_lambda_.3} parent=61 // pred_check_branch
          %346 = sbr.rel (%p344) target = $region70
        $region69: #{_lambda_.3} parent=61 // pred_region
          %s347 = smul.u32 2, %s13
          %s348 = smul.addr %s347, 4
          %s349 = scalar_lea.vmem %s2, %s348
          // Predicated region
          $region71: #{_lambda_.3} parent=69 // pred_check
            _
          $region72: #{_lambda_.3} parent=69 // pred_check_branch
            %351 = sbr.rel (0) target = $region74
          $region73: #{_lambda_.3} parent=69 // pred_region
            // Predicated region
            $region75: #{_lambda_.3} parent=73 // pred_check
              _
            $region76: #{_lambda_.3} parent=73 // pred_check_branch
              %353 = sbr.rel (0) target = $region78
            $region77: #{_lambda_.3} parent=73 // pred_region
              // Predicated region
              $region90: #{_lambda_.3} parent=77 // pred_check
                _
              $region91: #{_lambda_.3} parent=77 // pred_check_branch
                %370 = sbr.rel (0) target = $region93
              $region92: #{_lambda_.3} parent=77 // pred_region
                loop: start=0, step=1, limit=1
                $region94: #{_lambda_.3} parent=92 // loop_pre_header
                  _
                $region95: #{_lambda_.3} parent=92 // loop_header
                  %s372 = sphi 0, %s376
                  %p373 = scmp.ge.s32.totalorder %s372, 1
                  %s377 = sphi %s343, %s343
                  %s378 = sphi %s349, %s349
                $region96: #{_lambda_.3} parent=92 // loop_header_branch
                  %375 = sbr.rel (%p373) target = $region100
                $region97: #{_lambda_.3} parent=92 // loop_body
                  %v379 = vld [vmem:[%s377] sm:$0xff]
                  %380 = vst [vmem:[%s378] sm:$0xff] %v379
                  %v381 = vld [vmem:[%s377 + $0x8] sm:$0xff]
                  %382 = vst [vmem:[%s378 + $0x10] sm:$0xff] %v381
                $region98: #{_lambda_.3} parent=92 // loop_footer
                  %s376 = sadd.s32 1, %s372
                $region99: #{_lambda_.3} parent=92 // loop_footer_branch
                  %371 = sbr.rel target = $region95
                $region100: #{_lambda_.3} parent=92 // loop_exit
                  _
              $region93: #{_lambda_.3} parent=77 // pred_fallthru
                _
              // Predicated region
              $region101: #{_lambda_.3} parent=77 // pred_check
                _
              $region102: #{_lambda_.3} parent=77 // pred_check_branch
                %384 = sbr.rel target = $region104
              $region103: #{_lambda_.3} parent=77 // pred_region
                _
              $region104: #{_lambda_.3} parent=77 // pred_fallthru
                _
            $region78: #{_lambda_.3} parent=73 // pred_fallthru
              _
            // Predicated region
            $region79: #{_lambda_.3} parent=73 // pred_check
              _
            $region80: #{_lambda_.3} parent=73 // pred_check_branch
              %355 = sbr.rel target = $region82
            $region81: #{_lambda_.3} parent=73 // pred_region
              loop: start=0, step=1, limit=1
              $region83: #{_lambda_.3} parent=81 // loop_pre_header
                _
              $region84: #{_lambda_.3} parent=81 // loop_header
                %s358 = sphi 0, %s362
                %p359 = scmp.ge.s32.totalorder %s358, 1
                %s363 = sphi %s343, %s343
                %s364 = sphi %s349, %s349
              $region85: #{_lambda_.3} parent=81 // loop_header_branch
                %361 = sbr.rel (%p359) target = $region89
              $region86: #{_lambda_.3} parent=81 // loop_body
                %v365 = vld [vmem:[%s363] sm:$0xff]
                %366 = vst [vmem:[%s364] sm:$0xff] %v365
                %v367 = vld [vmem:[%s363 + $0x8] sm:$0xff]
                %368 = vst [vmem:[%s364 + $0x10] sm:$0xff] %v367
              $region87: #{_lambda_.3} parent=81 // loop_footer
                %s362 = sadd.s32 1, %s358
              $region88: #{_lambda_.3} parent=81 // loop_footer_branch
                %357 = sbr.rel target = $region84
              $region89: #{_lambda_.3} parent=81 // loop_exit
                _
            $region82: #{_lambda_.3} parent=73 // pred_fallthru
              _
          $region74: #{_lambda_.3} parent=69 // pred_fallthru
            _
          %385 = vnop
        $region70: #{_lambda_.3} parent=61 // pred_fallthru
          _
      $region62: #{_lambda_.3} parent=5 // pred_fallthru
        _
      %p386 = scmp.le.s32.totalorder 2, %s8
      // Predicated region
      $region105: #{_lambda_.3} parent=5 // pred_check
        %p387 = pneg %p386
      $region106: #{_lambda_.3} parent=5 // pred_check_branch
        %389 = sbr.rel (%p387) target = $region108
      $region107: #{_lambda_.3} parent=5 // pred_region
        %s390 = ssub.s32 %s8, 2
        // Predicated region
        $region109: #{_lambda_.3} parent=107 // pred_check
          %p391 = pneg %p84
        $region110: #{_lambda_.3} parent=107 // pred_check_branch
          %393 = sbr.rel (%p391) target = $region112
        $region111: #{_lambda_.3} parent=107 // pred_region
          %s394 = sand.u32 %s69, 1
          %s395 = sand.u32 %s69, 1
          %s396 = smul.addr %s395, 16
          %s397 = scalar_lea.vmem [#allocation3], %s396
        $region112: #{_lambda_.3} parent=107 // pred_fallthru
          _
      $region108: #{_lambda_.3} parent=5 // pred_fallthru
        _
    $region6: #{_lambda_.3} parent=1 // loop_footer
      %s12 = sadd.s32 1, %s8
    $region7: #{_lambda_.3} parent=1 // loop_footer_branch
      %7 = sbr.rel target = $region3
    $region8: #{_lambda_.3} parent=1 // loop_exit
      _

// kernel: _lambda_.4
$region0: #{_lambda_.4}
  #allocation0 [shape = 'u32[]', space=smem, size = 0x4, offset = 0x4, fixed_abs, tag = 'smem constant byte address 0x4 - core index']
  #allocation1 [shape = 'u32[144,128]{1,0:T(1,128)}', space=vmem, size = 0x12000, scoped, tag = 'internal scratch']
  %s0 = inlined_call_operand.vmem [shape: bf16[16,144], index: 0, kind: input, shape index: {}]
  %s1 = inlined_call_operand.vmem [shape: bf16[144,512], index: 1, kind: input, shape index: {}, may-alias: {1,2,3,4}]
  %s2 = inlined_call_operand.vmem [shape: bf16[144,512], index: 2, kind: input, shape index: {}, may-alias: {1,2,3,4}]
  %s3 = inlined_call_operand.vmem [shape: bf16[144,512], index: 3, kind: input, shape index: {}, may-alias: {1,2,3,4}]
  %s4 = inlined_call_operand.vmem [shape: bf16[144,512], index: 4, kind: input, shape index: {}, may-alias: {1,2,3,4}]
  %s5 = inlined_call_operand.vmem [shape: f32[8,128], index: 5, kind: output, shape index: {0}]
  %s6 = inlined_call_operand.vmem [shape: f32[8,128], index: 6, kind: output, shape index: {1}]
  %7 = xla_tuple %s5, %s6
  %s8 = sld [smem:[#allocation0]]
  $region202: #{_lambda_.4} parent=0
    _
  %s10 = ssub.s32 1, %s8
  %s11 = scalar_select 0, %s10, %s8
  $region1: #{_lambda_.4} parent=0
    #allocation2 [shape = 'u8[36864]{0}', space=vmem, size = 0x9000, scoped, tag = 'input window, operand 1, single buffered']
    #allocation3 [shape = 'u8[36864]{0}', space=vmem, size = 0x9000, scoped, tag = 'input window, operand 2, single buffered']
    #allocation4 [shape = 'u8[36864]{0}', space=vmem, size = 0x9000, scoped, tag = 'input window, operand 3, single buffered']
    #allocation5 [shape = 'u8[36864]{0}', space=vmem, size = 0x9000, scoped, tag = 'input window, operand 4, single buffered']
    // Predicated region
    $region2: #{_lambda_.4} parent=1 // pred_check
      _
    $region3: #{_lambda_.4} parent=1 // pred_check_branch
      %13 = sbr.rel (0) target = $region5
    $region4: #{_lambda_.4} parent=1 // pred_region
      _
    $region5: #{_lambda_.4} parent=1 // pred_fallthru
      _
    // Predicated region
    $region6: #{_lambda_.4} parent=1 // pred_check
      _
    $region7: #{_lambda_.4} parent=1 // pred_check_branch
      %15 = sbr.rel (0) target = $region9
    $region8: #{_lambda_.4} parent=1 // pred_region
      // Predicated region
      $region10: #{_lambda_.4} parent=8 // pred_check
        _
      $region11: #{_lambda_.4} parent=8 // pred_check_branch
        %17 = sbr.rel (0) target = $region13
      $region12: #{_lambda_.4} parent=8 // pred_region
        // Predicated region
        $region14: #{_lambda_.4} parent=12 // pred_check
          _
        $region15: #{_lambda_.4} parent=12 // pred_check_branch
          %19 = sbr.rel target = $region17
        $region16: #{_lambda_.4} parent=12 // pred_region
          // Predicated region
          $region29: #{_lambda_.4} parent=16 // pred_check
            _
          $region30: #{_lambda_.4} parent=16 // pred_check_branch
            %68 = sbr.rel (0) target = $region32
          $region31: #{_lambda_.4} parent=16 // pred_region
            loop: start=0, step=1, limit=1
            $region33: #{_lambda_.4} parent=31 // loop_pre_header
              _
            $region34: #{_lambda_.4} parent=31 // loop_header
              %s70 = sphi 0, %s74
              %p71 = scmp.ge.s32.totalorder %s70, 1
              %s75 = sphi %s1, %s1
              %s76 = sphi [#allocation2], [#allocation2]
            $region35: #{_lambda_.4} parent=31 // loop_header_branch
              %73 = sbr.rel (%p71) target = $region39
            $region36: #{_lambda_.4} parent=31 // loop_body
              _
            $region37: #{_lambda_.4} parent=31 // loop_footer
              %s74 = sadd.s32 1, %s70
            $region38: #{_lambda_.4} parent=31 // loop_footer_branch
              %69 = sbr.rel target = $region34
            $region39: #{_lambda_.4} parent=31 // loop_exit
              _
            loop: start=0, step=1, limit=1
            $region40: #{_lambda_.4} parent=31 // loop_pre_header
              _
            $region41: #{_lambda_.4} parent=31 // loop_header
              %s79 = sphi 0, %s83
              %p80 = scmp.ge.s32.totalorder %s79, 1
              %s84 = sphi %s1, %s1
              %s85 = sphi [#allocation2], [#allocation2]
            $region42: #{_lambda_.4} parent=31 // loop_header_branch
              %82 = sbr.rel (%p80) target = $region46
            $region43: #{_lambda_.4} parent=31 // loop_body
              %v86 = vld [vmem:[%s84] sm:$0xf]
              %87 = vst [vmem:[%s85] sm:$0xf] %v86
              %v88 = vld [vmem:[%s84 + $0x10] sm:$0xf]
              %89 = vst [vmem:[%s85 + $0x4] sm:$0xf] %v88
              %v90 = vld [vmem:[%s84 + $0x20] sm:$0xf]
              %91 = vst [vmem:[%s85 + $0x8] sm:$0xf] %v90
              %v92 = vld [vmem:[%s84 + $0x30] sm:$0xf]
              %93 = vst [vmem:[%s85 + $0xc] sm:$0xf] %v92
              %v94 = vld [vmem:[%s84 + $0x40] sm:$0xf]
              %95 = vst [vmem:[%s85 + $0x10] sm:$0xf] %v94
              %v96 = vld [vmem:[%s84 + $0x50] sm:$0xf]
              %97 = vst [vmem:[%s85 + $0x14] sm:$0xf] %v96
              %v98 = vld [vmem:[%s84 + $0x60] sm:$0xf]
              %99 = vst [vmem:[%s85 + $0x18] sm:$0xf] %v98
              %v100 = vld [vmem:[%s84 + $0x70] sm:$0xf]
              %101 = vst [vmem:[%s85 + $0x1c] sm:$0xf] %v100
              %v102 = vld [vmem:[%s84 + $0x80] sm:$0xf]
              %103 = vst [vmem:[%s85 + $0x20] sm:$0xf] %v102
              %v104 = vld [vmem:[%s84 + $0x90] sm:$0xf]
              %105 = vst [vmem:[%s85 + $0x24] sm:$0xf] %v104
              %v106 = vld [vmem:[%s84 + $0xa0] sm:$0xf]
              %107 = vst [vmem:[%s85 + $0x28] sm:$0xf] %v106
              %v108 = vld [vmem:[%s84 + $0xb0] sm:$0xf]
              %109 = vst [vmem:[%s85 + $0x2c] sm:$0xf] %v108
              %v110 = vld [vmem:[%s84 + $0xc0] sm:$0xf]
              %111 = vst [vmem:[%s85 + $0x30] sm:$0xf] %v110
              %v112 = vld [vmem:[%s84 + $0xd0] sm:$0xf]
              %113 = vst [vmem:[%s85 + $0x34] sm:$0xf] %v112
              %v114 = vld [vmem:[%s84 + $0xe0] sm:$0xf]
              %115 = vst [vmem:[%s85 + $0x38] sm:$0xf] %v114
              %v116 = vld [vmem:[%s84 + $0xf0] sm:$0xf]
              %117 = vst [vmem:[%s85 + $0x3c] sm:$0xf] %v116
              %v118 = vld [vmem:[%s84 + $0x100] sm:$0xf]
              %119 = vst [vmem:[%s85 + $0x40] sm:$0xf] %v118
              %v120 = vld [vmem:[%s84 + $0x110] sm:$0xf]
              %121 = vst [vmem:[%s85 + $0x44] sm:$0xf] %v120
            $region44: #{_lambda_.4} parent=31 // loop_footer
              %s83 = sadd.s32 1, %s79
            $region45: #{_lambda_.4} parent=31 // loop_footer_branch
              %78 = sbr.rel target = $region41
            $region46: #{_lambda_.4} parent=31 // loop_exit
              _
          $region32: #{_lambda_.4} parent=16 // pred_fallthru
            _
        $region17: #{_lambda_.4} parent=12 // pred_fallthru
          _
        // Predicated region
        $region18: #{_lambda_.4} parent=12 // pred_check
          _
        $region19: #{_lambda_.4} parent=12 // pred_check_branch
          %21 = sbr.rel (0) target = $region21
        $region20: #{_lambda_.4} parent=12 // pred_region
          loop: start=0, step=1, limit=1
          $region22: #{_lambda_.4} parent=20 // loop_pre_header
            _
          $region23: #{_lambda_.4} parent=20 // loop_header
            %s24 = sphi 0, %s28
            %p25 = scmp.ge.s32.totalorder %s24, 1
            %s29 = sphi %s1, %s1
            %s30 = sphi [#allocation2], [#allocation2]
          $region24: #{_lambda_.4} parent=20 // loop_header_branch
            %27 = sbr.rel (%p25) target = $region28
          $region25: #{_lambda_.4} parent=20 // loop_body
            %v31 = vld [vmem:[%s29] sm:$0xf]
            %32 = vst [vmem:[%s30] sm:$0xf] %v31
            %v33 = vld [vmem:[%s29 + $0x10] sm:$0xf]
            %34 = vst [vmem:[%s30 + $0x4] sm:$0xf] %v33
            %v35 = vld [vmem:[%s29 + $0x20] sm:$0xf]
            %36 = vst [vmem:[%s30 + $0x8] sm:$0xf] %v35
            %v37 = vld [vmem:[%s29 + $0x30] sm:$0xf]
            %38 = vst [vmem:[%s30 + $0xc] sm:$0xf] %v37
            %v39 = vld [vmem:[%s29 + $0x40] sm:$0xf]
            %40 = vst [vmem:[%s30 + $0x10] sm:$0xf] %v39
            %v41 = vld [vmem:[%s29 + $0x50] sm:$0xf]
            %42 = vst [vmem:[%s30 + $0x14] sm:$0xf] %v41
            %v43 = vld [vmem:[%s29 + $0x60] sm:$0xf]
            %44 = vst [vmem:[%s30 + $0x18] sm:$0xf] %v43
            %v45 = vld [vmem:[%s29 + $0x70] sm:$0xf]
            %46 = vst [vmem:[%s30 + $0x1c] sm:$0xf] %v45
            %v47 = vld [vmem:[%s29 + $0x80] sm:$0xf]
            %48 = vst [vmem:[%s30 + $0x20] sm:$0xf] %v47
            %v49 = vld [vmem:[%s29 + $0x90] sm:$0xf]
            %50 = vst [vmem:[%s30 + $0x24] sm:$0xf] %v49
            %v51 = vld [vmem:[%s29 + $0xa0] sm:$0xf]
            %52 = vst [vmem:[%s30 + $0x28] sm:$0xf] %v51
            %v53 = vld [vmem:[%s29 + $0xb0] sm:$0xf]
            %54 = vst [vmem:[%s30 + $0x2c] sm:$0xf] %v53
            %v55 = vld [vmem:[%s29 + $0xc0] sm:$0xf]
            %56 = vst [vmem:[%s30 + $0x30] sm:$0xf] %v55
            %v57 = vld [vmem:[%s29 + $0xd0] sm:$0xf]
            %58 = vst [vmem:[%s30 + $0x34] sm:$0xf] %v57
            %v59 = vld [vmem:[%s29 + $0xe0] sm:$0xf]
            %60 = vst [vmem:[%s30 + $0x38] sm:$0xf] %v59
            %v61 = vld [vmem:[%s29 + $0xf0] sm:$0xf]
            %62 = vst [vmem:[%s30 + $0x3c] sm:$0xf] %v61
            %v63 = vld [vmem:[%s29 + $0x100] sm:$0xf]
            %64 = vst [vmem:[%s30 + $0x40] sm:$0xf] %v63
            %v65 = vld [vmem:[%s29 + $0x110] sm:$0xf]
            %66 = vst [vmem:[%s30 + $0x44] sm:$0xf] %v65
          $region26: #{_lambda_.4} parent=20 // loop_footer
            %s28 = sadd.s32 1, %s24
          $region27: #{_lambda_.4} parent=20 // loop_footer_branch
            %23 = sbr.rel target = $region23
          $region28: #{_lambda_.4} parent=20 // loop_exit
            _
        $region21: #{_lambda_.4} parent=12 // pred_fallthru
          _
      $region13: #{_lambda_.4} parent=8 // pred_fallthru
        _
      %122 = vnop
    $region9: #{_lambda_.4} parent=1 // pred_fallthru
      _
    // Predicated region
    $region47: #{_lambda_.4} parent=1 // pred_check
      _
    $region48: #{_lambda_.4} parent=1 // pred_check_branch
      %124 = sbr.rel (0) target = $region50
    $region49: #{_lambda_.4} parent=1 // pred_region
      %s125 = sadd.s32 0, 1
      %s126 = smul.addr %s125, 4
      %s127 = scalar_lea.vmem %s2, %s126
      // Predicated region
      $region51: #{_lambda_.4} parent=49 // pred_check
        _
      $region52: #{_lambda_.4} parent=49 // pred_check_branch
        %129 = sbr.rel (0) target = $region54
      $region53: #{_lambda_.4} parent=49 // pred_region
        // Predicated region
        $region55: #{_lambda_.4} parent=53 // pred_check
          _
        $region56: #{_lambda_.4} parent=53 // pred_check_branch
          %131 = sbr.rel target = $region58
        $region57: #{_lambda_.4} parent=53 // pred_region
          // Predicated region
          $region70: #{_lambda_.4} parent=57 // pred_check
            _
          $region71: #{_lambda_.4} parent=57 // pred_check_branch
            %180 = sbr.rel (0) target = $region73
          $region72: #{_lambda_.4} parent=57 // pred_region
            loop: start=0, step=1, limit=1
            $region74: #{_lambda_.4} parent=72 // loop_pre_header
              _
            $region75: #{_lambda_.4} parent=72 // loop_header
              %s182 = sphi 0, %s186
              %p183 = scmp.ge.s32.totalorder %s182, 1
              %s187 = sphi %s127, %s127
              %s188 = sphi [#allocation3], [#allocation3]
            $region76: #{_lambda_.4} parent=72 // loop_header_branch
              %185 = sbr.rel (%p183) target = $region80
            $region77: #{_lambda_.4} parent=72 // loop_body
              _
            $region78: #{_lambda_.4} parent=72 // loop_footer
              %s186 = sadd.s32 1, %s182
            $region79: #{_lambda_.4} parent=72 // loop_footer_branch
              %181 = sbr.rel target = $region75
            $region80: #{_lambda_.4} parent=72 // loop_exit
              _
            loop: start=0, step=1, limit=1
            $region81: #{_lambda_.4} parent=72 // loop_pre_header
              _
            $region82: #{_lambda_.4} parent=72 // loop_header
              %s191 = sphi 0, %s195
              %p192 = scmp.ge.s32.totalorder %s191, 1
              %s196 = sphi %s127, %s127
              %s197 = sphi [#allocation3], [#allocation3]
            $region83: #{_lambda_.4} parent=72 // loop_header_branch
              %194 = sbr.rel (%p192) target = $region87
            $region84: #{_lambda_.4} parent=72 // loop_body
              %v198 = vld [vmem:[%s196] sm:$0xf]
              %199 = vst [vmem:[%s197] sm:$0xf] %v198
              %v200 = vld [vmem:[%s196 + $0x10] sm:$0xf]
              %201 = vst [vmem:[%s197 + $0x4] sm:$0xf] %v200
              %v202 = vld [vmem:[%s196 + $0x20] sm:$0xf]
              %203 = vst [vmem:[%s197 + $0x8] sm:$0xf] %v202
              %v204 = vld [vmem:[%s196 + $0x30] sm:$0xf]
              %205 = vst [vmem:[%s197 + $0xc] sm:$0xf] %v204
              %v206 = vld [vmem:[%s196 + $0x40] sm:$0xf]
              %207 = vst [vmem:[%s197 + $0x10] sm:$0xf] %v206
              %v208 = vld [vmem:[%s196 + $0x50] sm:$0xf]
              %209 = vst [vmem:[%s197 + $0x14] sm:$0xf] %v208
              %v210 = vld [vmem:[%s196 + $0x60] sm:$0xf]
              %211 = vst [vmem:[%s197 + $0x18] sm:$0xf] %v210
              %v212 = vld [vmem:[%s196 + $0x70] sm:$0xf]
              %213 = vst [vmem:[%s197 + $0x1c] sm:$0xf] %v212
              %v214 = vld [vmem:[%s196 + $0x80] sm:$0xf]
              %215 = vst [vmem:[%s197 + $0x20] sm:$0xf] %v214
              %v216 = vld [vmem:[%s196 + $0x90] sm:$0xf]
              %217 = vst [vmem:[%s197 + $0x24] sm:$0xf] %v216
              %v218 = vld [vmem:[%s196 + $0xa0] sm:$0xf]
              %219 = vst [vmem:[%s197 + $0x28] sm:$0xf] %v218
              %v220 = vld [vmem:[%s196 + $0xb0] sm:$0xf]
              %221 = vst [vmem:[%s197 + $0x2c] sm:$0xf] %v220
              %v222 = vld [vmem:[%s196 + $0xc0] sm:$0xf]
              %223 = vst [vmem:[%s197 + $0x30] sm:$0xf] %v222
              %v224 = vld [vmem:[%s196 + $0xd0] sm:$0xf]
              %225 = vst [vmem:[%s197 + $0x34] sm:$0xf] %v224
              %v226 = vld [vmem:[%s196 + $0xe0] sm:$0xf]
              %227 = vst [vmem:[%s197 + $0x38] sm:$0xf] %v226
              %v228 = vld [vmem:[%s196 + $0xf0] sm:$0xf]
              %229 = vst [vmem:[%s197 + $0x3c] sm:$0xf] %v228
              %v230 = vld [vmem:[%s196 + $0x100] sm:$0xf]
              %231 = vst [vmem:[%s197 + $0x40] sm:$0xf] %v230
              %v232 = vld [vmem:[%s196 + $0x110] sm:$0xf]
              %233 = vst [vmem:[%s197 + $0x44] sm:$0xf] %v232
            $region85: #{_lambda_.4} parent=72 // loop_footer
              %s195 = sadd.s32 1, %s191
            $region86: #{_lambda_.4} parent=72 // loop_footer_branch
              %190 = sbr.rel target = $region82
            $region87: #{_lambda_.4} parent=72 // loop_exit
              _
          $region73: #{_lambda_.4} parent=57 // pred_fallthru
            _
        $region58: #{_lambda_.4} parent=53 // pred_fallthru
          _
        // Predicated region
        $region59: #{_lambda_.4} parent=53 // pred_check
          _
        $region60: #{_lambda_.4} parent=53 // pred_check_branch
          %133 = sbr.rel (0) target = $region62
        $region61: #{_lambda_.4} parent=53 // pred_region
          loop: start=0, step=1, limit=1
          $region63: #{_lambda_.4} parent=61 // loop_pre_header
            _
          $region64: #{_lambda_.4} parent=61 // loop_header
            %s136 = sphi 0, %s140
            %p137 = scmp.ge.s32.totalorder %s136, 1
            %s141 = sphi %s127, %s127
            %s142 = sphi [#allocation3], [#allocation3]
          $region65: #{_lambda_.4} parent=61 // loop_header_branch
            %139 = sbr.rel (%p137) target = $region69
          $region66: #{_lambda_.4} parent=61 // loop_body
            %v143 = vld [vmem:[%s141] sm:$0xf]
            %144 = vst [vmem:[%s142] sm:$0xf] %v143
            %v145 = vld [vmem:[%s141 + $0x10] sm:$0xf]
            %146 = vst [vmem:[%s142 + $0x4] sm:$0xf] %v145
            %v147 = vld [vmem:[%s141 + $0x20] sm:$0xf]
            %148 = vst [vmem:[%s142 + $0x8] sm:$0xf] %v147
            %v149 = vld [vmem:[%s141 + $0x30] sm:$0xf]
            %150 = vst [vmem:[%s142 + $0xc] sm:$0xf] %v149
            %v151 = vld [vmem:[%s141 + $0x40] sm:$0xf]
            %152 = vst [vmem:[%s142 + $0x10] sm:$0xf] %v151
            %v153 = vld [vmem:[%s141 + $0x50] sm:$0xf]
            %154 = vst [vmem:[%s142 + $0x14] sm:$0xf] %v153
            %v155 = vld [vmem:[%s141 + $0x60] sm:$0xf]
            %156 = vst [vmem:[%s142 + $0x18] sm:$0xf] %v155
            %v157 = vld [vmem:[%s141 + $0x70] sm:$0xf]
            %158 = vst [vmem:[%s142 + $0x1c] sm:$0xf] %v157
            %v159 = vld [vmem:[%s141 + $0x80] sm:$0xf]
            %160 = vst [vmem:[%s142 + $0x20] sm:$0xf] %v159
            %v161 = vld [vmem:[%s141 + $0x90] sm:$0xf]
            %162 = vst [vmem:[%s142 + $0x24] sm:$0xf] %v161
            %v163 = vld [vmem:[%s141 + $0xa0] sm:$0xf]
            %164 = vst [vmem:[%s142 + $0x28] sm:$0xf] %v163
            %v165 = vld [vmem:[%s141 + $0xb0] sm:$0xf]
            %166 = vst [vmem:[%s142 + $0x2c] sm:$0xf] %v165
            %v167 = vld [vmem:[%s141 + $0xc0] sm:$0xf]
            %168 = vst [vmem:[%s142 + $0x30] sm:$0xf] %v167
            %v169 = vld [vmem:[%s141 + $0xd0] sm:$0xf]
            %170 = vst [vmem:[%s142 + $0x34] sm:$0xf] %v169
            %v171 = vld [vmem:[%s141 + $0xe0] sm:$0xf]
            %172 = vst [vmem:[%s142 + $0x38] sm:$0xf] %v171
            %v173 = vld [vmem:[%s141 + $0xf0] sm:$0xf]
            %174 = vst [vmem:[%s142 + $0x3c] sm:$0xf] %v173
            %v175 = vld [vmem:[%s141 + $0x100] sm:$0xf]
            %176 = vst [vmem:[%s142 + $0x40] sm:$0xf] %v175
            %v177 = vld [vmem:[%s141 + $0x110] sm:$0xf]
            %178 = vst [vmem:[%s142 + $0x44] sm:$0xf] %v177
          $region67: #{_lambda_.4} parent=61 // loop_footer
            %s140 = sadd.s32 1, %s136
          $region68: #{_lambda_.4} parent=61 // loop_footer_branch
            %135 = sbr.rel target = $region64
          $region69: #{_lambda_.4} parent=61 // loop_exit
            _
        $region62: #{_lambda_.4} parent=53 // pred_fallthru
          _
      $region54: #{_lambda_.4} parent=49 // pred_fallthru
        _
      %234 = vnop
    $region50: #{_lambda_.4} parent=1 // pred_fallthru
      _
    // Predicated region
    $region88: #{_lambda_.4} parent=1 // pred_check
      _
    $region89: #{_lambda_.4} parent=1 // pred_check_branch
      %236 = sbr.rel (0) target = $region91
    $region90: #{_lambda_.4} parent=1 // pred_region
      %s237 = sadd.s32 0, 2
      %s238 = smul.addr %s237, 4
      %s239 = scalar_lea.vmem %s3, %s238
      // Predicated region
      $region92: #{_lambda_.4} parent=90 // pred_check
        _
      $region93: #{_lambda_.4} parent=90 // pred_check_branch
        %241 = sbr.rel (0) target = $region95
      $region94: #{_lambda_.4} parent=90 // pred_region
        // Predicated region
        $region96: #{_lambda_.4} parent=94 // pred_check
          _
        $region97: #{_lambda_.4} parent=94 // pred_check_branch
          %243 = sbr.rel target = $region99
        $region98: #{_lambda_.4} parent=94 // pred_region
          // Predicated region
          $region111: #{_lambda_.4} parent=98 // pred_check
            _
          $region112: #{_lambda_.4} parent=98 // pred_check_branch
            %292 = sbr.rel (0) target = $region114
          $region113: #{_lambda_.4} parent=98 // pred_region
            loop: start=0, step=1, limit=1
            $region115: #{_lambda_.4} parent=113 // loop_pre_header
              _
            $region116: #{_lambda_.4} parent=113 // loop_header
              %s294 = sphi 0, %s298
              %p295 = scmp.ge.s32.totalorder %s294, 1
              %s299 = sphi %s239, %s239
              %s300 = sphi [#allocation4], [#allocation4]
            $region117: #{_lambda_.4} parent=113 // loop_header_branch
              %297 = sbr.rel (%p295) target = $region121
            $region118: #{_lambda_.4} parent=113 // loop_body
              _
            $region119: #{_lambda_.4} parent=113 // loop_footer
              %s298 = sadd.s32 1, %s294
            $region120: #{_lambda_.4} parent=113 // loop_footer_branch
              %293 = sbr.rel target = $region116
            $region121: #{_lambda_.4} parent=113 // loop_exit
              _
            loop: start=0, step=1, limit=1
            $region122: #{_lambda_.4} parent=113 // loop_pre_header
              _
            $region123: #{_lambda_.4} parent=113 // loop_header
              %s303 = sphi 0, %s307
              %p304 = scmp.ge.s32.totalorder %s303, 1
              %s308 = sphi %s239, %s239
              %s309 = sphi [#allocation4], [#allocation4]
            $region124: #{_lambda_.4} parent=113 // loop_header_branch
              %306 = sbr.rel (%p304) target = $region128
            $region125: #{_lambda_.4} parent=113 // loop_body
              %v310 = vld [vmem:[%s308] sm:$0xf]
              %311 = vst [vmem:[%s309] sm:$0xf] %v310
              %v312 = vld [vmem:[%s308 + $0x10] sm:$0xf]
              %313 = vst [vmem:[%s309 + $0x4] sm:$0xf] %v312
              %v314 = vld [vmem:[%s308 + $0x20] sm:$0xf]
              %315 = vst [vmem:[%s309 + $0x8] sm:$0xf] %v314
              %v316 = vld [vmem:[%s308 + $0x30] sm:$0xf]
              %317 = vst [vmem:[%s309 + $0xc] sm:$0xf] %v316
              %v318 = vld [vmem:[%s308 + $0x40] sm:$0xf]
              %319 = vst [vmem:[%s309 + $0x10] sm:$0xf] %v318
              %v320 = vld [vmem:[%s308 + $0x50] sm:$0xf]
              %321 = vst [vmem:[%s309 + $0x14] sm:$0xf] %v320
              %v322 = vld [vmem:[%s308 + $0x60] sm:$0xf]
              %323 = vst [vmem:[%s309 + $0x18] sm:$0xf] %v322
              %v324 = vld [vmem:[%s308 + $0x70] sm:$0xf]
              %325 = vst [vmem:[%s309 + $0x1c] sm:$0xf] %v324
              %v326 = vld [vmem:[%s308 + $0x80] sm:$0xf]
              %327 = vst [vmem:[%s309 + $0x20] sm:$0xf] %v326
              %v328 = vld [vmem:[%s308 + $0x90] sm:$0xf]
              %329 = vst [vmem:[%s309 + $0x24] sm:$0xf] %v328
              %v330 = vld [vmem:[%s308 + $0xa0] sm:$0xf]
              %331 = vst [vmem:[%s309 + $0x28] sm:$0xf] %v330
              %v332 = vld [vmem:[%s308 + $0xb0] sm:$0xf]
              %333 = vst [vmem:[%s309 + $0x2c] sm:$0xf] %v332
              %v334 = vld [vmem:[%s308 + $0xc0] sm:$0xf]
              %335 = vst [vmem:[%s309 + $0x30] sm:$0xf] %v334
              %v336 = vld [vmem:[%s308 + $0xd0] sm:$0xf]
              %337 = vst [vmem:[%s309 + $0x34] sm:$0xf] %v336
              %v338 = vld [vmem:[%s308 + $0xe0] sm:$0xf]
              %339 = vst [vmem:[%s309 + $0x38] sm:$0xf] %v338
              %v340 = vld [vmem:[%s308 + $0xf0] sm:$0xf]
              %341 = vst [vmem:[%s309 + $0x3c] sm:$0xf] %v340
              %v342 = vld [vmem:[%s308 + $0x100] sm:$0xf]
              %343 = vst [vmem:[%s309 + $0x40] sm:$0xf] %v342
              %v344 = vld [vmem:[%s308 + $0x110] sm:$0xf]
              %345 = vst [vmem:[%s309 + $0x44] sm:$0xf] %v344
            $region126: #{_lambda_.4} parent=113 // loop_footer
              %s307 = sadd.s32 1, %s303
            $region127: #{_lambda_.4} parent=113 // loop_footer_branch
              %302 = sbr.rel target = $region123
            $region128: #{_lambda_.4} parent=113 // loop_exit
              _
          $region114: #{_lambda_.4} parent=98 // pred_fallthru
            _
        $region99: #{_lambda_.4} parent=94 // pred_fallthru
          _
        // Predicated region
        $region100: #{_lambda_.4} parent=94 // pred_check
          _
        $region101: #{_lambda_.4} parent=94 // pred_check_branch
          %245 = sbr.rel (0) target = $region103
        $region102: #{_lambda_.4} parent=94 // pred_region
          loop: start=0, step=1, limit=1
          $region104: #{_lambda_.4} parent=102 // loop_pre_header
            _
          $region105: #{_lambda_.4} parent=102 // loop_header
            %s248 = sphi 0, %s252
            %p249 = scmp.ge.s32.totalorder %s248, 1
            %s253 = sphi %s239, %s239
            %s254 = sphi [#allocation4], [#allocation4]
          $region106: #{_lambda_.4} parent=102 // loop_header_branch
            %251 = sbr.rel (%p249) target = $region110
          $region107: #{_lambda_.4} parent=102 // loop_body
            %v255 = vld [vmem:[%s253] sm:$0xf]
            %256 = vst [vmem:[%s254] sm:$0xf] %v255
            %v257 = vld [vmem:[%s253 + $0x10] sm:$0xf]
            %258 = vst [vmem:[%s254 + $0x4] sm:$0xf] %v257
            %v259 = vld [vmem:[%s253 + $0x20] sm:$0xf]
            %260 = vst [vmem:[%s254 + $0x8] sm:$0xf] %v259
            %v261 = vld [vmem:[%s253 + $0x30] sm:$0xf]
            %262 = vst [vmem:[%s254 + $0xc] sm:$0xf] %v261
            %v263 = vld [vmem:[%s253 + $0x40] sm:$0xf]
            %264 = vst [vmem:[%s254 + $0x10] sm:$0xf] %v263
            %v265 = vld [vmem:[%s253 + $0x50] sm:$0xf]
            %266 = vst [vmem:[%s254 + $0x14] sm:$0xf] %v265
            %v267 = vld [vmem:[%s253 + $0x60] sm:$0xf]
            %268 = vst [vmem:[%s254 + $0x18] sm:$0xf] %v267
            %v269 = vld [vmem:[%s253 + $0x70] sm:$0xf]
            %270 = vst [vmem:[%s254 + $0x1c] sm:$0xf] %v269
            %v271 = vld [vmem:[%s253 + $0x80] sm:$0xf]
            %272 = vst [vmem:[%s254 + $0x20] sm:$0xf] %v271
            %v273 = vld [vmem:[%s253 + $0x90] sm:$0xf]
            %274 = vst [vmem:[%s254 + $0x24] sm:$0xf] %v273
            %v275 = vld [vmem:[%s253 + $0xa0] sm:$0xf]
            %276 = vst [vmem:[%s254 + $0x28] sm:$0xf] %v275
            %v277 = vld [vmem:[%s253 + $0xb0] sm:$0xf]
            %278 = vst [vmem:[%s254 + $0x2c] sm:$0xf] %v277
            %v279 = vld [vmem:[%s253 + $0xc0] sm:$0xf]
            %280 = vst [vmem:[%s254 + $0x30] sm:$0xf] %v279
            %v281 = vld [vmem:[%s253 + $0xd0] sm:$0xf]
            %282 = vst [vmem:[%s254 + $0x34] sm:$0xf] %v281
            %v283 = vld [vmem:[%s253 + $0xe0] sm:$0xf]
            %284 = vst [vmem:[%s254 + $0x38] sm:$0xf] %v283
            %v285 = vld [vmem:[%s253 + $0xf0] sm:$0xf]
            %286 = vst [vmem:[%s254 + $0x3c] sm:$0xf] %v285
            %v287 = vld [vmem:[%s253 + $0x100] sm:$0xf]
            %288 = vst [vmem:[%s254 + $0x40] sm:$0xf] %v287
            %v289 = vld [vmem:[%s253 + $0x110] sm:$0xf]
            %290 = vst [vmem:[%s254 + $0x44] sm:$0xf] %v289
          $region108: #{_lambda_.4} parent=102 // loop_footer
            %s252 = sadd.s32 1, %s248
          $region109: #{_lambda_.4} parent=102 // loop_footer_branch
            %247 = sbr.rel target = $region105
          $region110: #{_lambda_.4} parent=102 // loop_exit
            _
        $region103: #{_lambda_.4} parent=94 // pred_fallthru
          _
      $region95: #{_lambda_.4} parent=90 // pred_fallthru
        _
      %346 = vnop
    $region91: #{_lambda_.4} parent=1 // pred_fallthru
      _
    // Predicated region
    $region129: #{_lambda_.4} parent=1 // pred_check
      _
    $region130: #{_lambda_.4} parent=1 // pred_check_branch
      %348 = sbr.rel (0) target = $region132
    $region131: #{_lambda_.4} parent=1 // pred_region
      %s349 = sadd.s32 0, 3
      %s350 = smul.addr %s349, 4
      %s351 = scalar_lea.vmem %s4, %s350
      // Predicated region
      $region133: #{_lambda_.4} parent=131 // pred_check
        _
      $region134: #{_lambda_.4} parent=131 // pred_check_branch
        %353 = sbr.rel (0) target = $region136
      $region135: #{_lambda_.4} parent=131 // pred_region
        // Predicated region
        $region137: #{_lambda_.4} parent=135 // pred_check
          _
        $region138: #{_lambda_.4} parent=135 // pred_check_branch
          %355 = sbr.rel target = $region140
        $region139: #{_lambda_.4} parent=135 // pred_region
          // Predicated region
          $region152: #{_lambda_.4} parent=139 // pred_check
            _
          $region153: #{_lambda_.4} parent=139 // pred_check_branch
            %404 = sbr.rel (0) target = $region155
          $region154: #{_lambda_.4} parent=139 // pred_region
            loop: start=0, step=1, limit=1
            $region156: #{_lambda_.4} parent=154 // loop_pre_header
              _
            $region157: #{_lambda_.4} parent=154 // loop_header
              %s406 = sphi 0, %s410
              %p407 = scmp.ge.s32.totalorder %s406, 1
              %s411 = sphi %s351, %s351
              %s412 = sphi [#allocation5], [#allocation5]
            $region158: #{_lambda_.4} parent=154 // loop_header_branch
              %409 = sbr.rel (%p407) target = $region162
            $region159: #{_lambda_.4} parent=154 // loop_body
              _
            $region160: #{_lambda_.4} parent=154 // loop_footer
              %s410 = sadd.s32 1, %s406
            $region161: #{_lambda_.4} parent=154 // loop_footer_branch
              %405 = sbr.rel target = $region157
            $region162: #{_lambda_.4} parent=154 // loop_exit
              _
            loop: start=0, step=1, limit=1
            $region163: #{_lambda_.4} parent=154 // loop_pre_header
              _
            $region164: #{_lambda_.4} parent=154 // loop_header
              %s415 = sphi 0, %s419
              %p416 = scmp.ge.s32.totalorder %s415, 1
              %s420 = sphi %s351, %s351
              %s421 = sphi [#allocation5], [#allocation5]
            $region165: #{_lambda_.4} parent=154 // loop_header_branch
              %418 = sbr.rel (%p416) target = $region169
            $region166: #{_lambda_.4} parent=154 // loop_body
              %v422 = vld [vmem:[%s420] sm:$0xf]
              %423 = vst [vmem:[%s421] sm:$0xf] %v422
              %v424 = vld [vmem:[%s420 + $0x10] sm:$0xf]
              %425 = vst [vmem:[%s421 + $0x4] sm:$0xf] %v424
              %v426 = vld [vmem:[%s420 + $0x20] sm:$0xf]
              %427 = vst [vmem:[%s421 + $0x8] sm:$0xf] %v426
              %v428 = vld [vmem:[%s420 + $0x30] sm:$0xf]
              %429 = vst [vmem:[%s421 + $0xc] sm:$0xf] %v428
              %v430 = vld [vmem:[%s420 + $0x40] sm:$0xf]
              %431 = vst [vmem:[%s421 + $0x10] sm:$0xf] %v430
              %v432 = vld [vmem:[%s420 + $0x50] sm:$0xf]
              %433 = vst [vmem:[%s421 + $0x14] sm:$0xf] %v432
              %v434 = vld [vmem:[%s420 + $0x60] sm:$0xf]
              %435 = vst [vmem:[%s421 + $0x18] sm:$0xf] %v434
              %v436 = vld [vmem:[%s420 + $0x70] sm:$0xf]
              %437 = vst [vmem:[%s421 + $0x1c] sm:$0xf] %v436
              %v438 = vld [vmem:[%s420 + $0x80] sm:$0xf]
              %439 = vst [vmem:[%s421 + $0x20] sm:$0xf] %v438
              %v440 = vld [vmem:[%s420 + $0x90] sm:$0xf]
              %441 = vst [vmem:[%s421 + $0x24] sm:$0xf] %v440
              %v442 = vld [vmem:[%s420 + $0xa0] sm:$0xf]
              %443 = vst [vmem:[%s421 + $0x28] sm:$0xf] %v442
              %v444 = vld [vmem:[%s420 + $0xb0] sm:$0xf]
              %445 = vst [vmem:[%s421 + $0x2c] sm:$0xf] %v444
              %v446 = vld [vmem:[%s420 + $0xc0] sm:$0xf]
              %447 = vst [vmem:[%s421 + $0x30] sm:$0xf] %v446
              %v448 = vld [vmem:[%s420 + $0xd0] sm:$0xf]
              %449 = vst [vmem:[%s421 + $0x34] sm:$0xf] %v448
              %v450 = vld [vmem:[%s420 + $0xe0] sm:$0xf]
              %451 = vst [vmem:[%s421 + $0x38] sm:$0xf] %v450
              %v452 = vld [vmem:[%s420 + $0xf0] sm:$0xf]
              %453 = vst [vmem:[%s421 + $0x3c] sm:$0xf] %v452
              %v454 = vld [vmem:[%s420 + $0x100] sm:$0xf]
              %455 = vst [vmem:[%s421 + $0x40] sm:$0xf] %v454
              %v456 = vld [vmem:[%s420 + $0x110] sm:$0xf]
              %457 = vst [vmem:[%s421 + $0x44] sm:$0xf] %v456
            $region167: #{_lambda_.4} parent=154 // loop_footer
              %s419 = sadd.s32 1, %s415
            $region168: #{_lambda_.4} parent=154 // loop_footer_branch
              %414 = sbr.rel target = $region164
            $region169: #{_lambda_.4} parent=154 // loop_exit
              _
          $region155: #{_lambda_.4} parent=139 // pred_fallthru
            _
        $region140: #{_lambda_.4} parent=135 // pred_fallthru
          _
        // Predicated region
        $region141: #{_lambda_.4} parent=135 // pred_check
          _
        $region142: #{_lambda_.4} parent=135 // pred_check_branch
          %357 = sbr.rel (0) target = $region144
        $region143: #{_lambda_.4} parent=135 // pred_region
          loop: start=0, step=1, limit=1
          $region145: #{_lambda_.4} parent=143 // loop_pre_header
            _
          $region146: #{_lambda_.4} parent=143 // loop_header
            %s360 = sphi 0, %s364
            %p361 = scmp.ge.s32.totalorder %s360, 1
            %s365 = sphi %s351, %s351
            %s366 = sphi [#allocation5], [#allocation5]
          $region147: #{_lambda_.4} parent=143 // loop_header_branch
            %363 = sbr.rel (%p361) target = $region151
          $region148: #{_lambda_.4} parent=143 // loop_body
            %v367 = vld [vmem:[%s365] sm:$0xf]
            %368 = vst [vmem:[%s366] sm:$0xf] %v367
            %v369 = vld [vmem:[%s365 + $0x10] sm:$0xf]
            %370 = vst [vmem:[%s366 + $0x4] sm:$0xf] %v369
            %v371 = vld [vmem:[%s365 + $0x20] sm:$0xf]
            %372 = vst [vmem:[%s366 + $0x8] sm:$0xf] %v371
            %v373 = vld [vmem:[%s365 + $0x30] sm:$0xf]
            %374 = vst [vmem:[%s366 + $0xc] sm:$0xf] %v373
            %v375 = vld [vmem:[%s365 + $0x40] sm:$0xf]
            %376 = vst [vmem:[%s366 + $0x10] sm:$0xf] %v375
            %v377 = vld [vmem:[%s365 + $0x50] sm:$0xf]
            %378 = vst [vmem:[%s366 + $0x14] sm:$0xf] %v377
            %v379 = vld [vmem:[%s365 + $0x60] sm:$0xf]
            %380 = vst [vmem:[%s366 + $0x18] sm:$0xf] %v379
            %v381 = vld [vmem:[%s365 + $0x70] sm:$0xf]
            %382 = vst [vmem:[%s366 + $0x1c] sm:$0xf] %v381
            %v383 = vld [vmem:[%s365 + $0x80] sm:$0xf]
            %384 = vst [vmem:[%s366 + $0x20] sm:$0xf] %v383
            %v385 = vld [vmem:[%s365 + $0x90] sm:$0xf]
            %386 = vst [vmem:[%s366 + $0x24] sm:$0xf] %v385
            %v387 = vld [vmem:[%s365 + $0xa0] sm:$0xf]
            %388 = vst [vmem:[%s366 + $0x28] sm:$0xf] %v387
            %v389 = vld [vmem:[%s365 + $0xb0] sm:$0xf]
            %390 = vst [vmem:[%s366 + $0x2c] sm:$0xf] %v389
            %v391 = vld [vmem:[%s365 + $0xc0] sm:$0xf]
            %392 = vst [vmem:[%s366 + $0x30] sm:$0xf] %v391
            %v393 = vld [vmem:[%s365 + $0xd0] sm:$0xf]
            %394 = vst [vmem:[%s366 + $0x34] sm:$0xf] %v393
            %v395 = vld [vmem:[%s365 + $0xe0] sm:$0xf]
            %396 = vst [vmem:[%s366 + $0x38] sm:$0xf] %v395
            %v397 = vld [vmem:[%s365 + $0xf0] sm:$0xf]
            %398 = vst [vmem:[%s366 + $0x3c] sm:$0xf] %v397
            %v399 = vld [vmem:[%s365 + $0x100] sm:$0xf]
            %400 = vst [vmem:[%s366 + $0x40] sm:$0xf] %v399
            %v401 = vld [vmem:[%s365 + $0x110] sm:$0xf]
            %402 = vst [vmem:[%s366 + $0x44] sm:$0xf] %v401
          $region149: #{_lambda_.4} parent=143 // loop_footer
            %s364 = sadd.s32 1, %s360
          $region150: #{_lambda_.4} parent=143 // loop_footer_branch
            %359 = sbr.rel target = $region146
          $region151: #{_lambda_.4} parent=143 // loop_exit
            _
        $region144: #{_lambda_.4} parent=135 // pred_fallthru
          _
      $region136: #{_lambda_.4} parent=131 // pred_fallthru
        _
      %458 = vnop
    $region132: #{_lambda_.4} parent=1 // pred_fallthru
      _
    // Predicated region
    $region170: #{_lambda_.4} parent=1 // pred_check
      _
    $region171: #{_lambda_.4} parent=1 // pred_check_branch
      %460 = sbr.rel (0) target = $region173
    $region172: #{_lambda_.4} parent=1 // pred_region
      _
    $region173: #{_lambda_.4} parent=1 // pred_fallthru
      _
    // Predicated region
    $region174: #{_lambda_.4} parent=1 // pred_check
      _
    $region175: #{_lambda_.4} parent=1 // pred_check_branch
      %462 = sbr.rel (0) target = $region177
    $region176: #{_lambda_.4} parent=1 // pred_region
      _
    $region177: #{_lambda_.4} parent=1 // pred_fallthru
      _
    // Predicated region
    $region178: #{_lambda_.4} parent=1 // pred_check
      _
    $region179: #{_lambda_.4} parent=1 // pred_check_branch
      %464 = sbr.rel (0) target = $region181
    $region180: #{_lambda_.4} parent=1 // pred_region
      _
    $region181: #{_lambda_.4} parent=1 // pred_fallthru
      _
    // Predicated region
    $region182: #{_lambda_.4} parent=1 // pred_check
      _
    $region183: #{_lambda_.4} parent=1 // pred_check_branch
      %466 = sbr.rel (0) target = $region185
    $region184: #{_lambda_.4} parent=1 // pred_region
      _
    $region185: #{_lambda_.4} parent=1 // pred_fallthru
      _
    %s467 = sadd.s32 0, 1
    %s468 = sadd.s32 0, 2
    %s469 = sadd.s32 0, 3
    %v471 = vld [vmem:[%s0] sm:$0xff]
    %v472 = vld [vmem:[%s0 + $0x8] sm:$0xff]
    %v473 = vld [vmem:[#allocation2] sm:$0xf]
    %v474 = vld [vmem:[#allocation2 + $0x4] sm:$0xf]
    %v475 = vld [vmem:[#allocation2 + $0x8] sm:$0xf]
    %v476 = vld [vmem:[#allocation2 + $0xc] sm:$0xf]
    %v477 = vld [vmem:[#allocation2 + $0x10] sm:$0xf]
    %v478 = vld [vmem:[#allocation2 + $0x14] sm:$0xf]
    %v479 = vld [vmem:[#allocation2 + $0x18] sm:$0xf]
    %v480 = vld [vmem:[#allocation2 + $0x1c] sm:$0xf]
    %v481 = vld [vmem:[#allocation2 + $0x20] sm:$0xf]
    %v482 = vld [vmem:[#allocation2 + $0x24] sm:$0xf]
    %v483 = vld [vmem:[#allocation2 + $0x28] sm:$0xf]
    %v484 = vld [vmem:[#allocation2 + $0x2c] sm:$0xf]
    %v485 = vld [vmem:[#allocation2 + $0x30] sm:$0xf]
    %v486 = vld [vmem:[#allocation2 + $0x34] sm:$0xf]
    %v487 = vld [vmem:[#allocation2 + $0x38] sm:$0xf]
    %v488 = vld [vmem:[#allocation2 + $0x3c] sm:$0xf]
    %v489 = vld [vmem:[#allocation2 + $0x40] sm:$0xf]
    %v490 = vld [vmem:[#allocation2 + $0x44] sm:$0xf]
    %v493 = vunpack.c.l.b16 %v471
    %v494 = vunpack.c.h.b16 %v471
    %v495 = vunpack.c.l.b16 %v472
    %v496 = vunpack.c.h.b16 %v472
    %v497 = vpack.c.b16 %v495, %v493
    %v498 = vpack.c.b16 %v496, %v494
    %v518 = vunpack.c.l.b16 %v473
    %v519 = vunpack.c.l.b16 %v474
    %v520 = vunpack.c.l.b16 %v475
    %v521 = vunpack.c.l.b16 %v476
    %v522 = vunpack.c.l.b16 %v477
    %v523 = vunpack.c.l.b16 %v478
    %v524 = vunpack.c.l.b16 %v479
    %v525 = vunpack.c.l.b16 %v480
    %v526 = vunpack.c.l.b16 %v481
    %v527 = vunpack.c.l.b16 %v482
    %v528 = vunpack.c.l.b16 %v483
    %v529 = vunpack.c.l.b16 %v484
    %v530 = vunpack.c.l.b16 %v485
    %v531 = vunpack.c.l.b16 %v486
    %v532 = vunpack.c.l.b16 %v487
    %v533 = vunpack.c.l.b16 %v488
    %v534 = vunpack.c.l.b16 %v489
    %v535 = vunpack.c.l.b16 %v490
    %v536 = vpack.c.b16 %v519, %v518
    %v537 = vpack.c.b16 %v521, %v520
    %v538 = vpack.c.b16 %v523, %v522
    %v539 = vpack.c.b16 %v525, %v524
    %v540 = vpack.c.b16 %v527, %v526
    %v541 = vpack.c.b16 %v529, %v528
    %v542 = vpack.c.b16 %v531, %v530
    %v543 = vpack.c.b16 %v533, %v532
    %v544 = vpack.c.b16 %v535, %v534
    %vm554 = vcmask 130048
    %v556 = vsel %vm554, %v498, 0
    %558 = vmatprep.subr.bf16.mxu0 0
    %559 = vmatpush1.bf16.msra.mxu0 %v536
    %560 = vmatprep.subr.bf16.mxu0 0
    %561 = vmatpush1.bf16.msra.mxu0 %v537
    %562 = vmatprep.subr.bf16.mxu0 0
    %563 = vmatpush1.bf16.msra.mxu0 %v538
    %564 = vmatprep.subr.bf16.mxu0 0
    %565 = vmatpush1.bf16.msra.mxu0 %v539
    %566 = vmatprep.subr.bf16.mxu0 0
    %567 = vmatpush1.bf16.msra.mxu0 %v540
    %568 = vmatprep.subr.bf16.mxu0 0
    %569 = vmatpush1.bf16.msra.mxu0 %v541
    %570 = vmatprep.subr.bf16.mxu0 0
    %571 = vmatpush1.bf16.msra.mxu0 %v542
    %572 = vmatprep.subr.bf16.mxu0 0
    %573 = vmatpush1.bf16.msra.mxu0 %v543
    %574 = vmatprep.subr.bf16.mxu0 0
    %575 = vmatpush1.bf16.msra.mxu0 %v544
    %576 = vmatprep.subr.bf16.mxu0 0
    %577 = vmatpush1.bf16.msra.mxu0 0
    %578 = vmatprep.subr.bf16.mxu0 0
    %579 = vmatpush1.bf16.msra.mxu0 0
    %580 = vmatprep.subr.bf16.mxu0 0
    %581 = vmatpush1.bf16.msra.mxu0 0
    %582 = vmatprep.subr.bf16.mxu0 0
    %583 = vmatpush1.bf16.msra.mxu0 0
    %584 = vmatprep.subr.bf16.mxu0 0
    %585 = vmatpush1.bf16.msra.mxu0 0
    %586 = vmatprep.subr.bf16.mxu0 0
    %587 = vmatpush1.bf16.msra.mxu0 0
    %588 = vmatprep.subr.bf16.mxu0 0
    %589 = vmatpush1.bf16.msra.mxu0 0
    %590 = vmatprep.mubr.bf16.mxu0 %v556
    %591 = vmatmul.mubr.bf16.gmra.mrb[0].mxu0 %v497
    %v592 = vpop.f32.mrb[0].mxu0
    %v593 = vadd.f32 0.0, %v592
    %v594 = vpop.f32.mrb[0].mxu0
    %v595 = vpop.f32.mrb[0].mxu0
    %v596 = vadd.f32 0.0, %v595
    %v597 = vpop.f32.mrb[0].mxu0
    %598 = vdwg.mxu0
    %v599 = vmul.f32 %v593, %v593
    %v600 = vmul.f32 %v596, %v596
    %v601 = vadd.f32 %v599, %v600
    %v602 = vld [vmem:[#allocation3] sm:$0xf]
    %v603 = vld [vmem:[#allocation3 + $0x4] sm:$0xf]
    %v604 = vld [vmem:[#allocation3 + $0x8] sm:$0xf]
    %v605 = vld [vmem:[#allocation3 + $0xc] sm:$0xf]
    %v606 = vld [vmem:[#allocation3 + $0x10] sm:$0xf]
    %v607 = vld [vmem:[#allocation3 + $0x14] sm:$0xf]
    %v608 = vld [vmem:[#allocation3 + $0x18] sm:$0xf]
    %v609 = vld [vmem:[#allocation3 + $0x1c] sm:$0xf]
    %v610 = vld [vmem:[#allocation3 + $0x20] sm:$0xf]
    %v611 = vld [vmem:[#allocation3 + $0x24] sm:$0xf]
    %v612 = vld [vmem:[#allocation3 + $0x28] sm:$0xf]
    %v613 = vld [vmem:[#allocation3 + $0x2c] sm:$0xf]
    %v614 = vld [vmem:[#allocation3 + $0x30] sm:$0xf]
    %v615 = vld [vmem:[#allocation3 + $0x34] sm:$0xf]
    %v616 = vld [vmem:[#allocation3 + $0x38] sm:$0xf]
    %v617 = vld [vmem:[#allocation3 + $0x3c] sm:$0xf]
    %v618 = vld [vmem:[#allocation3 + $0x40] sm:$0xf]
    %v619 = vld [vmem:[#allocation3 + $0x44] sm:$0xf]
    %v638 = vunpack.c.l.b16 %v602
    %v639 = vunpack.c.l.b16 %v603
    %v640 = vunpack.c.l.b16 %v604
    %v641 = vunpack.c.l.b16 %v605
    %v642 = vunpack.c.l.b16 %v606
    %v643 = vunpack.c.l.b16 %v607
    %v644 = vunpack.c.l.b16 %v608
    %v645 = vunpack.c.l.b16 %v609
    %v646 = vunpack.c.l.b16 %v610
    %v647 = vunpack.c.l.b16 %v611
    %v648 = vunpack.c.l.b16 %v612
    %v649 = vunpack.c.l.b16 %v613
    %v650 = vunpack.c.l.b16 %v614
    %v651 = vunpack.c.l.b16 %v615
    %v652 = vunpack.c.l.b16 %v616
    %v653 = vunpack.c.l.b16 %v617
    %v654 = vunpack.c.l.b16 %v618
    %v655 = vunpack.c.l.b16 %v619
    %v656 = vpack.c.b16 %v639, %v638
    %v657 = vpack.c.b16 %v641, %v640
    %v658 = vpack.c.b16 %v643, %v642
    %v659 = vpack.c.b16 %v645, %v644
    %v660 = vpack.c.b16 %v647, %v646
    %v661 = vpack.c.b16 %v649, %v648
    %v662 = vpack.c.b16 %v651, %v650
    %v663 = vpack.c.b16 %v653, %v652
    %v664 = vpack.c.b16 %v655, %v654
    %674 = vmatprep.subr.bf16.mxu0 0
    %675 = vmatpush1.bf16.msra.mxu0 %v656
    %676 = vmatprep.subr.bf16.mxu0 0
    %677 = vmatpush1.bf16.msra.mxu0 %v657
    %678 = vmatprep.subr.bf16.mxu0 0
    %679 = vmatpush1.bf16.msra.mxu0 %v658
    %680 = vmatprep.subr.bf16.mxu0 0
    %681 = vmatpush1.bf16.msra.mxu0 %v659
    %682 = vmatprep.subr.bf16.mxu0 0
    %683 = vmatpush1.bf16.msra.mxu0 %v660
    %684 = vmatprep.subr.bf16.mxu0 0
    %685 = vmatpush1.bf16.msra.mxu0 %v661
    %686 = vmatprep.subr.bf16.mxu0 0
    %687 = vmatpush1.bf16.msra.mxu0 %v662
    %688 = vmatprep.subr.bf16.mxu0 0
    %689 = vmatpush1.bf16.msra.mxu0 %v663
    %690 = vmatprep.subr.bf16.mxu0 0
    %691 = vmatpush1.bf16.msra.mxu0 %v664
    %692 = vmatprep.subr.bf16.mxu0 0
    %693 = vmatpush1.bf16.msra.mxu0 0
    %694 = vmatprep.subr.bf16.mxu0 0
    %695 = vmatpush1.bf16.msra.mxu0 0
    %696 = vmatprep.subr.bf16.mxu0 0
    %697 = vmatpush1.bf16.msra.mxu0 0
    %698 = vmatprep.subr.bf16.mxu0 0
    %699 = vmatpush1.bf16.msra.mxu0 0
    %700 = vmatprep.subr.bf16.mxu0 0
    %701 = vmatpush1.bf16.msra.mxu0 0
    %702 = vmatprep.subr.bf16.mxu0 0
    %703 = vmatpush1.bf16.msra.mxu0 0
    %704 = vmatprep.subr.bf16.mxu0 0
    %705 = vmatpush1.bf16.msra.mxu0 0
    %706 = vmatprep.mubr.bf16.mxu0 %v556
    %707 = vmatmul.mubr.bf16.gmra.mrb[0].mxu0 %v497
    %v708 = vpop.f32.mrb[0].mxu0
    %v709 = vadd.f32 0.0, %v708
    %v710 = vpop.f32.mrb[0].mxu0
    %v711 = vpop.f32.mrb[0].mxu0
    %v712 = vadd.f32 0.0, %v711
    %v713 = vpop.f32.mrb[0].mxu0
    %714 = vdwg.mxu0
    %v715 = vmul.f32 %v709, %v709
    %v716 = vmul.f32 %v712, %v712
    %v717 = vadd.f32 %v715, %v716
    %vm718 = vcmp.gt.f32.partialorder %v717, %v601
    %v719 = vsel %vm718, %v709, %v593
    %v720 = vsel %vm718, %v712, %v596
    %v721 = vsel %vm718, %v717, %v601
    %v722 = vld [vmem:[#allocation4] sm:$0xf]
    %v723 = vld [vmem:[#allocation4 + $0x4] sm:$0xf]
    %v724 = vld [vmem:[#allocation4 + $0x8] sm:$0xf]
    %v725 = vld [vmem:[#allocation4 + $0xc] sm:$0xf]
    %v726 = vld [vmem:[#allocation4 + $0x10] sm:$0xf]
    %v727 = vld [vmem:[#allocation4 + $0x14] sm:$0xf]
    %v728 = vld [vmem:[#allocation4 + $0x18] sm:$0xf]
    %v729 = vld [vmem:[#allocation4 + $0x1c] sm:$0xf]
    %v730 = vld [vmem:[#allocation4 + $0x20] sm:$0xf]
    %v731 = vld [vmem:[#allocation4 + $0x24] sm:$0xf]
    %v732 = vld [vmem:[#allocation4 + $0x28] sm:$0xf]
    %v733 = vld [vmem:[#allocation4 + $0x2c] sm:$0xf]
    %v734 = vld [vmem:[#allocation4 + $0x30] sm:$0xf]
    %v735 = vld [vmem:[#allocation4 + $0x34] sm:$0xf]
    %v736 = vld [vmem:[#allocation4 + $0x38] sm:$0xf]
    %v737 = vld [vmem:[#allocation4 + $0x3c] sm:$0xf]
    %v738 = vld [vmem:[#allocation4 + $0x40] sm:$0xf]
    %v739 = vld [vmem:[#allocation4 + $0x44] sm:$0xf]
    %v758 = vunpack.c.l.b16 %v722
    %v759 = vunpack.c.l.b16 %v723
    %v760 = vunpack.c.l.b16 %v724
    %v761 = vunpack.c.l.b16 %v725
    %v762 = vunpack.c.l.b16 %v726
    %v763 = vunpack.c.l.b16 %v727
    %v764 = vunpack.c.l.b16 %v728
    %v765 = vunpack.c.l.b16 %v729
    %v766 = vunpack.c.l.b16 %v730
    %v767 = vunpack.c.l.b16 %v731
    %v768 = vunpack.c.l.b16 %v732
    %v769 = vunpack.c.l.b16 %v733
    %v770 = vunpack.c.l.b16 %v734
    %v771 = vunpack.c.l.b16 %v735
    %v772 = vunpack.c.l.b16 %v736
    %v773 = vunpack.c.l.b16 %v737
    %v774 = vunpack.c.l.b16 %v738
    %v775 = vunpack.c.l.b16 %v739
    %v776 = vpack.c.b16 %v759, %v758
    %v777 = vpack.c.b16 %v761, %v760
    %v778 = vpack.c.b16 %v763, %v762
    %v779 = vpack.c.b16 %v765, %v764
    %v780 = vpack.c.b16 %v767, %v766
    %v781 = vpack.c.b16 %v769, %v768
    %v782 = vpack.c.b16 %v771, %v770
    %v783 = vpack.c.b16 %v773, %v772
    %v784 = vpack.c.b16 %v775, %v774
    %794 = vmatprep.subr.bf16.mxu0 0
    %795 = vmatpush1.bf16.msra.mxu0 %v776
    %796 = vmatprep.subr.bf16.mxu0 0
    %797 = vmatpush1.bf16.msra.mxu0 %v777
    %798 = vmatprep.subr.bf16.mxu0 0
    %799 = vmatpush1.bf16.msra.mxu0 %v778
    %800 = vmatprep.subr.bf16.mxu0 0
    %801 = vmatpush1.bf16.msra.mxu0 %v779
    %802 = vmatprep.subr.bf16.mxu0 0
    %803 = vmatpush1.bf16.msra.mxu0 %v780
    %804 = vmatprep.subr.bf16.mxu0 0
    %805 = vmatpush1.bf16.msra.mxu0 %v781
    %806 = vmatprep.subr.bf16.mxu0 0
    %807 = vmatpush1.bf16.msra.mxu0 %v782
    %808 = vmatprep.subr.bf16.mxu0 0
    %809 = vmatpush1.bf16.msra.mxu0 %v783
    %810 = vmatprep.subr.bf16.mxu0 0
    %811 = vmatpush1.bf16.msra.mxu0 %v784
    %812 = vmatprep.subr.bf16.mxu0 0
    %813 = vmatpush1.bf16.msra.mxu0 0
    %814 = vmatprep.subr.bf16.mxu0 0
    %815 = vmatpush1.bf16.msra.mxu0 0
    %816 = vmatprep.subr.bf16.mxu0 0
    %817 = vmatpush1.bf16.msra.mxu0 0
    %818 = vmatprep.subr.bf16.mxu0 0
    %819 = vmatpush1.bf16.msra.mxu0 0
    %820 = vmatprep.subr.bf16.mxu0 0
    %821 = vmatpush1.bf16.msra.mxu0 0
    %822 = vmatprep.subr.bf16.mxu0 0
    %823 = vmatpush1.bf16.msra.mxu0 0
    %824 = vmatprep.subr.bf16.mxu0 0
    %825 = vmatpush1.bf16.msra.mxu0 0
    %826 = vmatprep.mubr.bf16.mxu0 %v556
    %827 = vmatmul.mubr.bf16.gmra.mrb[0].mxu0 %v497
    %v828 = vpop.f32.mrb[0].mxu0
    %v829 = vadd.f32 0.0, %v828
    %v830 = vpop.f32.mrb[0].mxu0
    %v831 = vpop.f32.mrb[0].mxu0
    %v832 = vadd.f32 0.0, %v831
    %v833 = vpop.f32.mrb[0].mxu0
    %834 = vdwg.mxu0
    %v835 = vmul.f32 %v829, %v829
    %v836 = vmul.f32 %v832, %v832
    %v837 = vadd.f32 %v835, %v836
    %vm838 = vcmp.gt.f32.partialorder %v837, %v721
    %v839 = vsel %vm838, %v829, %v719
    %v840 = vsel %vm838, %v832, %v720
    %v841 = vsel %vm838, %v837, %v721
    %v842 = vld [vmem:[#allocation5] sm:$0xf]
    %v843 = vld [vmem:[#allocation5 + $0x4] sm:$0xf]
    %v844 = vld [vmem:[#allocation5 + $0x8] sm:$0xf]
    %v845 = vld [vmem:[#allocation5 + $0xc] sm:$0xf]
    %v846 = vld [vmem:[#allocation5 + $0x10] sm:$0xf]
    %v847 = vld [vmem:[#allocation5 + $0x14] sm:$0xf]
    %v848 = vld [vmem:[#allocation5 + $0x18] sm:$0xf]
    %v849 = vld [vmem:[#allocation5 + $0x1c] sm:$0xf]
    %v850 = vld [vmem:[#allocation5 + $0x20] sm:$0xf]
    %v851 = vld [vmem:[#allocation5 + $0x24] sm:$0xf]
    %v852 = vld [vmem:[#allocation5 + $0x28] sm:$0xf]
    %v853 = vld [vmem:[#allocation5 + $0x2c] sm:$0xf]
    %v854 = vld [vmem:[#allocation5 + $0x30] sm:$0xf]
    %v855 = vld [vmem:[#allocation5 + $0x34] sm:$0xf]
    %v856 = vld [vmem:[#allocation5 + $0x38] sm:$0xf]
    %v857 = vld [vmem:[#allocation5 + $0x3c] sm:$0xf]
    %v858 = vld [vmem:[#allocation5 + $0x40] sm:$0xf]
    %v859 = vld [vmem:[#allocation5 + $0x44] sm:$0xf]
    %v878 = vunpack.c.l.b16 %v842
    %v879 = vunpack.c.l.b16 %v843
    %v880 = vunpack.c.l.b16 %v844
    %v881 = vunpack.c.l.b16 %v845
    %v882 = vunpack.c.l.b16 %v846
    %v883 = vunpack.c.l.b16 %v847
    %v884 = vunpack.c.l.b16 %v848
    %v885 = vunpack.c.l.b16 %v849
    %v886 = vunpack.c.l.b16 %v850
    %v887 = vunpack.c.l.b16 %v851
    %v888 = vunpack.c.l.b16 %v852
    %v889 = vunpack.c.l.b16 %v853
    %v890 = vunpack.c.l.b16 %v854
    %v891 = vunpack.c.l.b16 %v855
    %v892 = vunpack.c.l.b16 %v856
    %v893 = vunpack.c.l.b16 %v857
    %v894 = vunpack.c.l.b16 %v858
    %v895 = vunpack.c.l.b16 %v859
    %v896 = vpack.c.b16 %v879, %v878
    %v897 = vpack.c.b16 %v881, %v880
    %v898 = vpack.c.b16 %v883, %v882
    %v899 = vpack.c.b16 %v885, %v884
    %v900 = vpack.c.b16 %v887, %v886
    %v901 = vpack.c.b16 %v889, %v888
    %v902 = vpack.c.b16 %v891, %v890
    %v903 = vpack.c.b16 %v893, %v892
    %v904 = vpack.c.b16 %v895, %v894
    %914 = vmatprep.subr.bf16.mxu0 0
    %915 = vmatpush1.bf16.msra.mxu0 %v896
    %916 = vmatprep.subr.bf16.mxu0 0
    %917 = vmatpush1.bf16.msra.mxu0 %v897
    %918 = vmatprep.subr.bf16.mxu0 0
    %919 = vmatpush1.bf16.msra.mxu0 %v898
    %920 = vmatprep.subr.bf16.mxu0 0
    %921 = vmatpush1.bf16.msra.mxu0 %v899
    %922 = vmatprep.subr.bf16.mxu0 0
    %923 = vmatpush1.bf16.msra.mxu0 %v900
    %924 = vmatprep.subr.bf16.mxu0 0
    %925 = vmatpush1.bf16.msra.mxu0 %v901
    %926 = vmatprep.subr.bf16.mxu0 0
    %927 = vmatpush1.bf16.msra.mxu0 %v902
    %928 = vmatprep.subr.bf16.mxu0 0
    %929 = vmatpush1.bf16.msra.mxu0 %v903
    %930 = vmatprep.subr.bf16.mxu0 0
    %931 = vmatpush1.bf16.msra.mxu0 %v904
    %932 = vmatprep.subr.bf16.mxu0 0
    %933 = vmatpush1.bf16.msra.mxu0 0
    %934 = vmatprep.subr.bf16.mxu0 0
    %935 = vmatpush1.bf16.msra.mxu0 0
    %936 = vmatprep.subr.bf16.mxu0 0
    %937 = vmatpush1.bf16.msra.mxu0 0
    %938 = vmatprep.subr.bf16.mxu0 0
    %939 = vmatpush1.bf16.msra.mxu0 0
    %940 = vmatprep.subr.bf16.mxu0 0
    %941 = vmatpush1.bf16.msra.mxu0 0
    %942 = vmatprep.subr.bf16.mxu0 0
    %943 = vmatpush1.bf16.msra.mxu0 0
    %944 = vmatprep.subr.bf16.mxu0 0
    %945 = vmatpush1.bf16.msra.mxu0 0
    %946 = vmatprep.mubr.bf16.mxu0 %v556
    %947 = vmatmul.mubr.bf16.gmra.mrb[0].mxu0 %v497
    %v948 = vpop.f32.mrb[0].mxu0
    %v949 = vadd.f32 0.0, %v948
    %v950 = vpop.f32.mrb[0].mxu0
    %v951 = vpop.f32.mrb[0].mxu0
    %v952 = vadd.f32 0.0, %v951
    %v953 = vpop.f32.mrb[0].mxu0
    %954 = vdwg.mxu0
    %v955 = vmul.f32 %v949, %v949
    %v956 = vmul.f32 %v952, %v952
    %v957 = vadd.f32 %v955, %v956
    %vm958 = vcmp.gt.f32.partialorder %v957, %v841
    %v959 = vsel %vm958, %v949, %v839
    %v960 = vsel %vm958, %v952, %v840
    %v961 = vmax.f32 %v959, 0.0
    %962 = vst [vmem:[%s5] sm:$0xff] %v961
    %v963 = vmax.f32 %v960, 0.0
    %964 = vst [vmem:[%s6] sm:$0xff] %v963
    // Predicated region
    $region186: #{_lambda_.4} parent=1 // pred_check
      _
    $region187: #{_lambda_.4} parent=1 // pred_check_branch
      %966 = sbr.rel (0) target = $region189
    $region188: #{_lambda_.4} parent=1 // pred_region
      _
    $region189: #{_lambda_.4} parent=1 // pred_fallthru
      _
    // Predicated region
    $region190: #{_lambda_.4} parent=1 // pred_check
      _
    $region191: #{_lambda_.4} parent=1 // pred_check_branch
      %968 = sbr.rel (0) target = $region193
    $region192: #{_lambda_.4} parent=1 // pred_region
      _
    $region193: #{_lambda_.4} parent=1 // pred_fallthru
      _
    // Predicated region
    $region194: #{_lambda_.4} parent=1 // pred_check
      _
    $region195: #{_lambda_.4} parent=1 // pred_check_branch
      %970 = sbr.rel (0) target = $region197
    $region196: #{_lambda_.4} parent=1 // pred_region
      _
    $region197: #{_lambda_.4} parent=1 // pred_fallthru
      _
    // Predicated region
    $region198: #{_lambda_.4} parent=1 // pred_check
      _
    $region199: #{_lambda_.4} parent=1 // pred_check_branch
      %972 = sbr.rel (0) target = $region201
    $region200: #{_lambda_.4} parent=1 // pred_region
      _
    $region201: #{_lambda_.4} parent=1 // pred_fallthru
      _

// kernel: _lambda_.5
$region0: #{_lambda_.5}
  #allocation0 [shape = 'u32[]', space=smem, size = 0x4, offset = 0x4, fixed_abs, tag = 'smem constant byte address 0x4 - core index']
  #allocation1 [shape = 'u32[144,128]{1,0:T(1,128)}', space=vmem, size = 0x12000, scoped, tag = 'internal scratch']
  %s0 = inlined_call_operand.vmem [shape: f32[8,128], index: 0, kind: input, shape index: {}]
  %s1 = inlined_call_operand.vmem [shape: f32[8,128], index: 1, kind: input, shape index: {}]
  %s2 = inlined_call_operand.vmem [shape: f32[8,128], index: 2, kind: output, shape index: {0}]
  %s3 = inlined_call_operand.vmem [shape: f32[8,128], index: 3, kind: output, shape index: {1}]
  %4 = xla_tuple %s2, %s3
  %s5 = sld [smem:[#allocation0]]
  $region26: #{_lambda_.5} parent=0
    _
  %s7 = ssub.s32 1, %s5
  %s8 = scalar_select 0, %s7, %s5
  // Predicated region
  $region2: #{_lambda_.5} parent=0 // pred_check
    _
  $region3: #{_lambda_.5} parent=0 // pred_check_branch
    %10 = sbr.rel (0) target = $region5
  $region4: #{_lambda_.5} parent=0 // pred_region
    _
  $region5: #{_lambda_.5} parent=0 // pred_fallthru
    _
  // Predicated region
  $region6: #{_lambda_.5} parent=0 // pred_check
    _
  $region7: #{_lambda_.5} parent=0 // pred_check_branch
    %12 = sbr.rel (0) target = $region9
  $region8: #{_lambda_.5} parent=0 // pred_region
    _
  $region9: #{_lambda_.5} parent=0 // pred_fallthru
    _
  %v13 = vlaneseq
  %v14 = vand.u32 %v13, 127
  %vm15 = vcmp.lt.s32.totalorder %v14, 98
  %v16 = vld [vmem:[%s0] sm:$0xff]
  %17 = vadd.xlane.f32.xlu0 %v16
  %v18 = vpop.xlane.xlu0 %17
  %v19 = vmul.f32 %v18, 0.010204081
  %v20 = vsub.f32 %v16, %v19
  %v21 = vsel %vm15, %v20, 0.0
  %v22 = vmul.f32 %v21, %v21
  %23 = vadd.xlane.f32.xlu0 %v22
  %v24 = vpop.xlane.xlu0 %23
  %v25 = vmul.f32 %v24, 0.010204081
  %v26 = vadd.f32 %v25, 1e-05
  %v27 = vrsqrt.pop %v26
  %v28 = vmul.f32 %v21, %v27
  %29 = vst [vmem:[%s2] sm:$0xff] %v28
  %v30 = vld [vmem:[%s1] sm:$0xff]
  %31 = vadd.xlane.f32.xlu0 %v30
  %v32 = vpop.xlane.xlu0 %31
  %v33 = vmul.f32 %v32, 0.010204081
  %v34 = vsub.f32 %v30, %v33
  %v35 = vsel %vm15, %v34, 0.0
  %v36 = vmul.f32 %v35, %v35
  %37 = vadd.xlane.f32.xlu0 %v36
  %v38 = vpop.xlane.xlu0 %37
  %v39 = vmul.f32 %v38, 0.010204081
  %v40 = vadd.f32 %v39, 1e-05
  %v41 = vrsqrt.pop %v40
  %v42 = vmul.f32 %v35, %v41
  %43 = vst [vmem:[%s3] sm:$0xff] %v42
  // Predicated region
  $region10: #{_lambda_.5} parent=0 // pred_check
    _
  $region11: #{_lambda_.5} parent=0 // pred_check_branch
    %45 = sbr.rel (0) target = $region13
  $region12: #{_lambda_.5} parent=0 // pred_region
    _
  $region13: #{_lambda_.5} parent=0 // pred_fallthru
    _
  // Predicated region
  $region14: #{_lambda_.5} parent=0 // pred_check
    _
  $region15: #{_lambda_.5} parent=0 // pred_check_branch
    %47 = sbr.rel (0) target = $region17
  $region16: #{_lambda_.5} parent=0 // pred_region
    _
  $region17: #{_lambda_.5} parent=0 // pred_fallthru
    _
  // Predicated region
  $region18: #{_lambda_.5} parent=0 // pred_check
    _
  $region19: #{_lambda_.5} parent=0 // pred_check_branch
    %49 = sbr.rel (0) target = $region21
  $region20: #{_lambda_.5} parent=0 // pred_region
    _
  $region21: #{_lambda_.5} parent=0 // pred_fallthru
    _
  // Predicated region
  $region22: #{_lambda_.5} parent=0 // pred_check
    _
  $region23: #{_lambda_.5} parent=0 // pred_check_branch
    %51 = sbr.rel (0) target = $region25
  $region24: #{_lambda_.5} parent=0 // pred_region
    _
  $region25: #{_lambda_.5} parent=0 // pred_fallthru
    _

</llo_original>
